<compile_context>
chip_gen: v7x
topology: tpu7x:2x2x1
jax: 0.10.0
libtpu: 0.0.40
codegen_flags: <defaults>
</compile_context>

<pallas_src>
import functools
import math

import jax
import jax.numpy as jnp
from jax import lax
from jax.experimental import pallas as pl
from jax.experimental.pallas import tpu as pltpu


NEG_INF = -1e30  # finite mask value: avoids exp(-inf - (-inf)) = NaN


def _pick_tile(n, candidates):
    for c in candidates:
        if n % c == 0:
            return c
    return n


# ---------------------------------------------------------------------------
# Linear projection kernel: out = x @ W + b   (bf16 inputs, f32 accumulation)
# ---------------------------------------------------------------------------
def _linear_kernel(x_ref, w_ref, b_ref, o_ref):
    acc = jnp.dot(x_ref[...], w_ref[...], preferred_element_type=jnp.float32)
    o_ref[...] = (acc + b_ref[...]).astype(o_ref.dtype)


def _linear(x2d, w, b, out_dtype):
    """x2d: (M, Cin) bf16, w: (Cin, Cout) bf16, b: (1, Cout) f32."""
    M, Cin = x2d.shape
    Cout = w.shape[1]
    tm = _pick_tile(M, (512, 256, 128, 64, 32, 16, 8))
    grid = (M // tm,)
    return pl.pallas_call(
        _linear_kernel,
        out_shape=jax.ShapeDtypeStruct((M, Cout), out_dtype),
        grid_spec=pltpu.PrefetchScalarGridSpec(
            num_scalar_prefetch=0,
            grid=grid,
            in_specs=[
                pl.BlockSpec((tm, Cin), lambda i: (i, 0)),
                # Constant index_map: Pallas keeps the same block resident and
                # does not re-DMA the weights / bias across grid steps.
                pl.BlockSpec((Cin, Cout), lambda i: (0, 0)),
                pl.BlockSpec((1, Cout), lambda i: (0, 0)),
            ],
            out_specs=pl.BlockSpec((tm, Cout), lambda i: (i, 0)),
        ),
        compiler_params=pltpu.CompilerParams(
            dimension_semantics=("parallel",)),
    )(x2d, w, b)


# ---------------------------------------------------------------------------
# Flash attention kernel (causal, all heads per invocation, online softmax)
# ---------------------------------------------------------------------------
def _flash_kernel(q_ref, k_ref, v_ref, o_ref, m_ref, l_ref, acc_ref, *, scale):
    qi = pl.program_id(1)
    ki = pl.program_id(2)
    tq = q_ref.shape[1]
    tk = k_ref.shape[1]

    @pl.when(ki == 0)
    def _init():
        m_ref[...] = jnp.full(m_ref.shape, NEG_INF, dtype=jnp.float32)
        l_ref[...] = jnp.zeros(l_ref.shape, dtype=jnp.float32)
        acc_ref[...] = jnp.zeros(acc_ref.shape, dtype=jnp.float32)

    # Causal: a kv tile contributes only if it is not entirely in the future.
    @pl.when(ki <= qi)
    def _compute():
        q = q_ref[...] * scale                      # (H, tq, D) bf16, scale on q
        k = k_ref[...]                              # (H, tk, D) bf16
        v = v_ref[...]                              # (H, tk, D) bf16

        # batched over heads -> (H, tq, tk) f32 scores
        s = jnp.einsum("htd,hsd->hts", q, k,
                       preferred_element_type=jnp.float32)

        # tile-relative causal mask (only the diagonal tile is actually cut)
        row = lax.broadcasted_iota(jnp.int32, (tq, tk), 0) + qi * tq
        col = lax.broadcasted_iota(jnp.int32, (tq, tk), 1) + ki * tk
        s = jnp.where((row >= col)[None, :, :], s, NEG_INF)

        m_prev = m_ref[...]                                         # (H, tq, 1)
        m_new = jnp.maximum(m_prev, jnp.max(s, axis=-1, keepdims=True))
        alpha = jnp.exp(m_prev - m_new)                             # (H, tq, 1)
        p = jnp.exp(s - m_new)                                      # (H, tq, tk)

        l_ref[...] = alpha * l_ref[...] + jnp.sum(p, axis=-1, keepdims=True)
        acc_ref[...] = alpha * acc_ref[...] + jnp.einsum(
            "hts,hsd->htd", p.astype(v.dtype), v,
            preferred_element_type=jnp.float32)
        m_ref[...] = m_new

    # The diagonal tile is the last contributing kv tile for this q tile:
    # finalize with deferred normalization (EUP reciprocal) and emit output.
    @pl.when(ki == qi)
    def _finalize():
        inv_l = pl.reciprocal(l_ref[...], approx=True)              # (H, tq, 1)
        o_ref[...] = (acc_ref[...] * inv_l).astype(o_ref.dtype)


def _flash_attention(q, k, v, *, scale):
    """q, k, v: (B, H, T, D) bf16 -> attention output (B, H, T, D) bf16."""
    B, H, T, D = q.shape
    tq = _pick_tile(T, (256, 128))
    tk = tq
    nq = T // tq
    nk = T // tk

    kernel = functools.partial(_flash_kernel, scale=scale)

    return pl.pallas_call(
        kernel,
        out_shape=jax.ShapeDtypeStruct((B, H, T, D), jnp.bfloat16),
        grid_spec=pltpu.PrefetchScalarGridSpec(
            num_scalar_prefetch=0,
            grid=(B, nq, nk),
            in_specs=[
                pl.BlockSpec((None, H, tq, D), lambda b, qi, ki: (b, 0, qi, 0)),
                pl.BlockSpec((None, H, tk, D), lambda b, qi, ki: (b, 0, ki, 0)),
                pl.BlockSpec((None, H, tk, D), lambda b, qi, ki: (b, 0, ki, 0)),
            ],
            out_specs=pl.BlockSpec((None, H, tq, D),
                                   lambda b, qi, ki: (b, 0, qi, 0)),
            scratch_shapes=[
                pltpu.VMEM((H, tq, 1), jnp.float32),   # running max m
                pltpu.VMEM((H, tq, 1), jnp.float32),   # running sum l
                pltpu.VMEM((H, tq, D), jnp.float32),   # output accumulator
            ],
        ),
        compiler_params=pltpu.CompilerParams(
            dimension_semantics=("parallel", "parallel", "arbitrary")),
    )(q, k, v)


# ---------------------------------------------------------------------------
# Full module forward
# ---------------------------------------------------------------------------
@functools.partial(jax.jit, static_argnames=("n_head",))
def causal_self_attention(x, w_qkv, b_qkv, w_proj, b_proj, n_head):
    """x: (B, T, C) float32.  Weights in (in, out) layout, biases 1-D."""
    B, T, C = x.shape
    assert C % n_head == 0
    D = C // n_head
    scale = 1.0 / math.sqrt(D)

    # bf16 matmul inputs (MXU peak), f32 accumulation inside the kernels.
    xb = x.astype(jnp.bfloat16).reshape(B * T, C)
    w_qkv_b = w_qkv.astype(jnp.bfloat16)
    w_proj_b = w_proj.astype(jnp.bfloat16)
    b_qkv2 = b_qkv.reshape(1, 3 * C).astype(jnp.float32)
    b_proj2 = b_proj.reshape(1, C).astype(jnp.float32)

    # --- c_attn ---
    qkv = _linear(xb, w_qkv_b, b_qkv2, out_dtype=jnp.bfloat16)   # (B*T, 3C)

    # split q/k/v and heads: (B, T, 3, H, D) -> (B, H, T, D)
    qkv = qkv.reshape(B, T, 3, n_head, D)
    q = jnp.transpose(qkv[:, :, 0], (0, 2, 1, 3))
    k = jnp.transpose(qkv[:, :, 1], (0, 2, 1, 3))
    v = jnp.transpose(qkv[:, :, 2], (0, 2, 1, 3))

    # --- causal scaled-dot-product attention (flash) ---
    y = _flash_attention(q, k, v, scale=scale)                   # (B, H, T, D)

    # merge heads: (B, H, T, D) -> (B*T, C)
    y = jnp.transpose(y, (0, 2, 1, 3)).reshape(B * T, C)

    # --- c_proj ---
    out = _linear(y, w_proj_b, b_proj2, out_dtype=x.dtype)       # (B*T, C)
    return out.reshape(B, T, C)


# ---------------------------------------------------------------------------
# Pure-JAX f32 reference mirroring the PyTorch forward
# ---------------------------------------------------------------------------
def reference(x, w_qkv, b_qkv, w_proj, b_proj, n_head):
    B, T, C = x.shape
    D = C // n_head
    qkv = x @ w_qkv + b_qkv
    q, k, v = jnp.split(qkv, 3, axis=-1)
    q = q.reshape(B, T, n_head, D).transpose(0, 2, 1, 3)
    k = k.reshape(B, T, n_head, D).transpose(0, 2, 1, 3)
    v = v.reshape(B, T, n_head, D).transpose(0, 2, 1, 3)
    s = jnp.einsum("bhtd,bhsd->bhts", q, k) / math.sqrt(D)
    mask = jnp.tril(jnp.ones((T, T), dtype=bool))
    s = jnp.where(mask[None, None], s, -jnp.inf)
    p = jax.nn.softmax(s, axis=-1)
    y = jnp.einsum("bhts,bhsd->bhtd", p, v)
    y = y.transpose(0, 2, 1, 3).reshape(B, T, C)
    return y @ w_proj + b_proj


if __name__ == "__main__":
    # small config consistent with the module: n_embd=32, n_head=4, seq=8, batch=2
    B, T, C, n_head = 2, 8, 32, 4

    key = jax.random.PRNGKey(0)
    kx, k1, k2, k3, k4 = jax.random.split(key, 5)

    x = jax.random.normal(kx, (B, T, C), dtype=jnp.float32)

    # nn.Linear params: c_attn (3C, C), c_proj (C, C) -- stored pre-transposed
    # to (in, out) for the kernels; biases are 1-D.
    w_qkv = jax.random.normal(k1, (C, 3 * C), dtype=jnp.float32) * 0.1
    b_qkv = jax.random.normal(k2, (3 * C,), dtype=jnp.float32) * 0.1
    w_proj = jax.random.normal(k3, (C, C), dtype=jnp.float32) * 0.1
    b_proj = jax.random.normal(k4, (C,), dtype=jnp.float32) * 0.1

    out = causal_self_attention(x, w_qkv, b_qkv, w_proj, b_proj, n_head=n_head)
    out = jax.block_until_ready(out)

    ref = reference(x, w_qkv, b_qkv, w_proj, b_proj, n_head)
    assert out.shape == ref.shape
    # bf16 matmul inputs => compare to the f32 reference with bf16-level tolerance.
    max_err = float(jnp.max(jnp.abs(out - ref)))
    assert jnp.allclose(out, ref, atol=3e-2, rtol=3e-2), (
        f"mismatch vs reference, max abs err {max_err:.3e}")

    print("KERNEL_OK")
</pallas_src>

<mosaic_0001>
module attributes {stable_mosaic.version = 11 : i64} {
  func.func @_linear_kernel(%arg0: i32, %arg1: memref<16x32xbf16, #tpu.memory_space<vmem>>, %arg2: memref<32x96xbf16, #tpu.memory_space<vmem>>, %arg3: memref<1x96xf32, #tpu.memory_space<vmem>>, %arg4: memref<16x96xbf16, #tpu.memory_space<vmem>>) attributes {dimension_semantics = [#tpu.dimension_semantics<parallel>], iteration_bounds = array<i64: 1>, scalar_prefetch = 0 : i64, scratch_operands = 0 : i64, tpu.core_type = #tpu.core_type<tc>, window_params = [{transform_indices = @transform_0, window_bounds = array<i64: 16, 32>}, {pipeline_mode = #tpu.pipeline_mode<synchronous>, transform_indices = @transform_1, window_bounds = array<i64: 32, 96>}, {pipeline_mode = #tpu.pipeline_mode<synchronous>, transform_indices = @transform_2, window_bounds = array<i64: 1, 96>}, {transform_indices = @transform_3, window_bounds = array<i64: 16, 96>}]} {
    %c0 = arith.constant 0 : index
    %c0_0 = arith.constant 0 : index
    %0 = vector.load %arg1[%c0, %c0_0] : memref<16x32xbf16, #tpu.memory_space<vmem>>, vector<16x32xbf16>
    %c0_1 = arith.constant 0 : index
    %c0_2 = arith.constant 0 : index
    %1 = vector.load %arg2[%c0_1, %c0_2] : memref<32x96xbf16, #tpu.memory_space<vmem>>, vector<32x96xbf16>
    %cst = arith.constant dense<0.000000e+00> : vector<16x96xf32>
    %2 = tpu.matmul %0, %1, %cst {dimension_numbers = #tpu.dot_dimension_numbers<[1], [0], [0], [1], [0, 0, 1, 1], [], []>} : vector<16x32xbf16>, vector<32x96xbf16>, vector<16x96xf32> -> vector<16x96xf32>
    %c0_3 = arith.constant 0 : index
    %c0_4 = arith.constant 0 : index
    %3 = vector.load %arg3[%c0_3, %c0_4] : memref<1x96xf32, #tpu.memory_space<vmem>>, vector<1x96xf32>
    %4 = vector.broadcast %3 : vector<1x96xf32> to vector<16x96xf32>
    %5 = arith.addf %2, %4 : vector<16x96xf32>
    %6 = arith.truncf %5 : vector<16x96xf32> to vector<16x96xbf16>
    %c0_5 = arith.constant 0 : index
    %c0_6 = arith.constant 0 : index
    %7 = vector.load %arg4[%c0_5, %c0_6] : memref<16x96xbf16, #tpu.memory_space<vmem>>, vector<16x96xbf16>
    tpu.vector_store %arg4[%c0_5, %c0_6], %6 {strides = array<i32>} : memref<16x96xbf16, #tpu.memory_space<vmem>>, vector<16x96xbf16>,
    return
  }
  func.func @transform_0(%arg0: i32) -> (i32, i32) {
    %c0_i32 = arith.constant 0 : i32
    %c0_i32_0 = arith.constant 0 : i32
    return %arg0, %c0_i32 : i32, i32
  }
  func.func @transform_1(%arg0: i32) -> (i32, i32) {
    %c0_i32 = arith.constant 0 : i32
    %c0_i32_0 = arith.constant 0 : i32
    %c0_i32_1 = arith.constant 0 : i32
    return %c0_i32, %c0_i32_0 : i32, i32
  }
  func.func @transform_2(%arg0: i32) -> (i32, i32) {
    %c0_i32 = arith.constant 0 : i32
    %c0_i32_0 = arith.constant 0 : i32
    %c0_i32_1 = arith.constant 0 : i32
    return %c0_i32, %c0_i32_0 : i32, i32
  }
  func.func @transform_3(%arg0: i32) -> (i32, i32) {
    %c0_i32 = arith.constant 0 : i32
    %c0_i32_0 = arith.constant 0 : i32
    return %arg0, %c0_i32 : i32, i32
  }
}

module attributes {stable_mosaic.version = 11 : i64} {
  func.func @_flash_kernel(%arg0: i32, %arg1: i32, %arg2: i32, %arg3: memref<1x4x8x8xbf16, #tpu.memory_space<vmem>>, %arg4: memref<1x4x8x8xbf16, #tpu.memory_space<vmem>>, %arg5: memref<1x4x8x8xbf16, #tpu.memory_space<vmem>>, %arg6: memref<1x4x8x8xbf16, #tpu.memory_space<vmem>>, %arg7: memref<4x8x1xf32, #tpu.memory_space<vmem>>, %arg8: memref<4x8x1xf32, #tpu.memory_space<vmem>>, %arg9: memref<4x8x8xf32, #tpu.memory_space<vmem>>) attributes {dimension_semantics = [#tpu.dimension_semantics<parallel>, #tpu.dimension_semantics<parallel>, #tpu.dimension_semantics<arbitrary>], iteration_bounds = array<i64: 2, 1, 1>, scalar_prefetch = 0 : i64, scratch_operands = 3 : i64, tpu.core_type = #tpu.core_type<tc>, window_params = [{transform_indices = @transform_0, window_bounds = array<i64: 1, 4, 8, 8>}, {transform_indices = @transform_1, window_bounds = array<i64: 1, 4, 8, 8>}, {transform_indices = @transform_2, window_bounds = array<i64: 1, 4, 8, 8>}, {transform_indices = @transform_3, window_bounds = array<i64: 1, 4, 8, 8>}]} {
    %c0_i32 = arith.constant 0 : i32
    %0 = arith.cmpi eq, %arg2, %c0_i32 : i32
    %1 = arith.extui %0 : i1 to i32
    %c0_i32_0 = arith.constant 0 : i32
    %2 = arith.cmpi ne, %1, %c0_i32_0 : i32
    scf.if %2 {
      %cst = arith.constant -1.000000e+30 : f32
      %9 = vector.broadcast %cst : f32 to vector<4x8x1xf32>
      %c0 = arith.constant 0 : index
      %c0_3 = arith.constant 0 : index
      %c0_4 = arith.constant 0 : index
      %10 = vector.load %arg7[%c0, %c0_3, %c0_4] : memref<4x8x1xf32, #tpu.memory_space<vmem>>, vector<4x8x1xf32>
      tpu.vector_store %arg7[%c0, %c0_3, %c0_4], %9 {strides = array<i32>} : memref<4x8x1xf32, #tpu.memory_space<vmem>>, vector<4x8x1xf32>,
      %cst_5 = arith.constant 0.000000e+00 : f32
      %11 = vector.broadcast %cst_5 : f32 to vector<4x8x1xf32>
      %c0_6 = arith.constant 0 : index
      %c0_7 = arith.constant 0 : index
      %c0_8 = arith.constant 0 : index
      %12 = vector.load %arg8[%c0_6, %c0_7, %c0_8] : memref<4x8x1xf32, #tpu.memory_space<vmem>>, vector<4x8x1xf32>
      tpu.vector_store %arg8[%c0_6, %c0_7, %c0_8], %11 {strides = array<i32>} : memref<4x8x1xf32, #tpu.memory_space<vmem>>, vector<4x8x1xf32>,
      %cst_9 = arith.constant 0.000000e+00 : f32
      %13 = vector.broadcast %cst_9 : f32 to vector<4x8x8xf32>
      %c0_10 = arith.constant 0 : index
      %c0_11 = arith.constant 0 : index
      %c0_12 = arith.constant 0 : index
      %14 = vector.load %arg9[%c0_10, %c0_11, %c0_12] : memref<4x8x8xf32, #tpu.memory_space<vmem>>, vector<4x8x8xf32>
      tpu.vector_store %arg9[%c0_10, %c0_11, %c0_12], %13 {strides = array<i32>} : memref<4x8x8xf32, #tpu.memory_space<vmem>>, vector<4x8x8xf32>,
    } else {
    }
    %3 = arith.cmpi sle, %arg2, %arg1 : i32
    %4 = arith.extui %3 : i1 to i32
    %c0_i32_1 = arith.constant 0 : i32
    %5 = arith.cmpi ne, %4, %c0_i32_1 : i32
    scf.if %5 {
      %c0 = arith.constant 0 : index
      %c0_3 = arith.constant 0 : index
      %c0_4 = arith.constant 0 : index
      %c0_5 = arith.constant 0 : index
      %9 = vector.load %arg3[%c0, %c0_3, %c0_4, %c0_5] : memref<1x4x8x8xbf16, #tpu.memory_space<vmem>>, vector<1x4x8x8xbf16>
      %10 = vector.shape_cast %9 : vector<1x4x8x8xbf16> to vector<4x8x8xbf16>
      %cst = arith.constant 3.535160e-01 : bf16
      %11 = vector.broadcast %cst : bf16 to vector<4x8x8xbf16>
      %12 = arith.mulf %10, %11 : vector<4x8x8xbf16>
      %c0_6 = arith.constant 0 : index
      %c0_7 = arith.constant 0 : index
      %c0_8 = arith.constant 0 : index
      %c0_9 = arith.constant 0 : index
      %13 = vector.load %arg4[%c0_6, %c0_7, %c0_8, %c0_9] : memref<1x4x8x8xbf16, #tpu.memory_space<vmem>>, vector<1x4x8x8xbf16>
      %14 = vector.shape_cast %13 : vector<1x4x8x8xbf16> to vector<4x8x8xbf16>
      %c0_10 = arith.constant 0 : index
      %c0_11 = arith.constant 0 : index
      %c0_12 = arith.constant 0 : index
      %c0_13 = arith.constant 0 : index
      %15 = vector.load %arg5[%c0_10, %c0_11, %c0_12, %c0_13] : memref<1x4x8x8xbf16, #tpu.memory_space<vmem>>, vector<1x4x8x8xbf16>
      %16 = vector.shape_cast %15 : vector<1x4x8x8xbf16> to vector<4x8x8xbf16>
      "tpu.trace_start"() <{level = 10 : i32, message = "htd,hsd->hts"}> : () -> ()
      %cst_14 = arith.constant dense<0.000000e+00> : vector<4x8x8xf32>
      %17 = tpu.matmul %12, %14, %cst_14 {dimension_numbers = #tpu.dot_dimension_numbers<[2], [2], [1], [1], [0, 0, 0, 1, 1, 1], [0], [0]>} : vector<4x8x8xbf16>, vector<4x8x8xbf16>, vector<4x8x8xf32> -> vector<4x8x8xf32>
      "tpu.trace_stop"() : () -> ()
      %18 = tpu.iota {dimensions = array<i32: 0>} : vector<8x8xi32>
      %c8_i32 = arith.constant 8 : i32
      %19 = arith.muli %arg1, %c8_i32 : i32
      %20 = vector.broadcast %19 : i32 to vector<8x8xi32>
      %21 = arith.addi %18, %20 : vector<8x8xi32>
      %22 = tpu.iota {dimensions = array<i32: 1>} : vector<8x8xi32>
      %c8_i32_15 = arith.constant 8 : i32
      %23 = arith.muli %arg2, %c8_i32_15 : i32
      %24 = vector.broadcast %23 : i32 to vector<8x8xi32>
      %25 = arith.addi %22, %24 : vector<8x8xi32>
      %26 = arith.cmpi sge, %21, %25 : vector<8x8xi32>
      %27 = vector.shape_cast %26 : vector<8x8xi1> to vector<1x8x8xi1>
      %cst_16 = arith.constant -1.000000e+30 : f32
      %28 = vector.shape_cast %27 : vector<1x8x8xi1> to vector<1x8x8xi1>
      %29 = vector.broadcast %28 : vector<1x8x8xi1> to vector<4x8x8xi1>
      %30 = vector.broadcast %cst_16 : f32 to vector<4x8x8xf32>
      %31 = arith.select %29, %17, %30 : vector<4x8x8xi1>, vector<4x8x8xf32>
      %c0_17 = arith.constant 0 : index
      %c0_18 = arith.constant 0 : index
      %c0_19 = arith.constant 0 : index
      %32 = vector.load %arg7[%c0_17, %c0_18, %c0_19] : memref<4x8x1xf32, #tpu.memory_space<vmem>>, vector<4x8x1xf32>
      %cst_20 = arith.constant dense<0xFF800000> : vector<4x8xf32>
      %33 = vector.multi_reduction <maximumf>, %31, %cst_20 [2] : vector<4x8x8xf32> to vector<4x8xf32>
      %34 = vector.shape_cast %33 : vector<4x8xf32> to vector<4x8x1xf32>
      %35 = arith.maximumf %32, %34 : vector<4x8x1xf32>
      %36 = arith.subf %32, %35 : vector<4x8x1xf32>
      %37 = math.exp %36 : vector<4x8x1xf32>
      %38 = vector.broadcast %35 : vector<4x8x1xf32> to vector<4x8x8xf32>
      %39 = arith.subf %31, %38 : vector<4x8x8xf32>
      %40 = math.exp %39 : vector<4x8x8xf32>
      %c0_21 = arith.constant 0 : index
      %c0_22 = arith.constant 0 : index
      %c0_23 = arith.constant 0 : index
      %41 = vector.load %arg8[%c0_21, %c0_22, %c0_23] : memref<4x8x1xf32, #tpu.memory_space<vmem>>, vector<4x8x1xf32>
      %42 = arith.mulf %37, %41 : vector<4x8x1xf32>
      %cst_24 = arith.constant dense<0.000000e+00> : vector<4x8xf32>
      %43 = vector.multi_reduction <add>, %40, %cst_24 [2] : vector<4x8x8xf32> to vector<4x8xf32>
      %44 = vector.shape_cast %43 : vector<4x8xf32> to vector<4x8x1xf32>
      %45 = arith.addf %42, %44 : vector<4x8x1xf32>
      %c0_25 = arith.constant 0 : index
      %c0_26 = arith.constant 0 : index
      %c0_27 = arith.constant 0 : index
      %46 = vector.load %arg8[%c0_25, %c0_26, %c0_27] : memref<4x8x1xf32, #tpu.memory_space<vmem>>, vector<4x8x1xf32>
      tpu.vector_store %arg8[%c0_25, %c0_26, %c0_27], %45 {strides = array<i32>} : memref<4x8x1xf32, #tpu.memory_space<vmem>>, vector<4x8x1xf32>,
      %c0_28 = arith.constant 0 : index
      %c0_29 = arith.constant 0 : index
      %c0_30 = arith.constant 0 : index
      %47 = vector.load %arg9[%c0_28, %c0_29, %c0_30] : memref<4x8x8xf32, #tpu.memory_space<vmem>>, vector<4x8x8xf32>
      %48 = vector.broadcast %37 : vector<4x8x1xf32> to vector<4x8x8xf32>
      %49 = arith.mulf %48, %47 : vector<4x8x8xf32>
      %50 = arith.truncf %40 : vector<4x8x8xf32> to vector<4x8x8xbf16>
      "tpu.trace_start"() <{level = 10 : i32, message = "hts,hsd->htd"}> : () -> ()
      %cst_31 = arith.constant dense<0.000000e+00> : vector<4x8x8xf32>
      %51 = tpu.matmul %50, %16, %cst_31 {dimension_numbers = #tpu.dot_dimension_numbers<[2], [1], [1], [2], [0, 0, 0, 1, 1, 2], [0], [0]>} : vector<4x8x8xbf16>, vector<4x8x8xbf16>, vector<4x8x8xf32> -> vector<4x8x8xf32>
      "tpu.trace_stop"() : () -> ()
      %52 = arith.addf %49, %51 : vector<4x8x8xf32>
      %c0_32 = arith.constant 0 : index
      %c0_33 = arith.constant 0 : index
      %c0_34 = arith.constant 0 : index
      %53 = vector.load %arg9[%c0_32, %c0_33, %c0_34] : memref<4x8x8xf32, #tpu.memory_space<vmem>>, vector<4x8x8xf32>
      tpu.vector_store %arg9[%c0_32, %c0_33, %c0_34], %52 {strides = array<i32>} : memref<4x8x8xf32, #tpu.memory_space<vmem>>, vector<4x8x8xf32>,
      %c0_35 = arith.constant 0 : index
      %c0_36 = arith.constant 0 : index
      %c0_37 = arith.constant 0 : index
      %54 = vector.load %arg7[%c0_35, %c0_36, %c0_37] : memref<4x8x1xf32, #tpu.memory_space<vmem>>, vector<4x8x1xf32>
      tpu.vector_store %arg7[%c0_35, %c0_36, %c0_37], %35 {strides = array<i32>} : memref<4x8x1xf32, #tpu.memory_space<vmem>>, vector<4x8x1xf32>,
    } else {
    }
    %6 = arith.cmpi eq, %arg2, %arg1 : i32
    %7 = arith.extui %6 : i1 to i32
    %c0_i32_2 = arith.constant 0 : i32
    %8 = arith.cmpi ne, %7, %c0_i32_2 : i32
    scf.if %8 {
      %c0 = arith.constant 0 : index
      %c0_3 = arith.constant 0 : index
      %c0_4 = arith.constant 0 : index
      %9 = vector.load %arg8[%c0, %c0_3, %c0_4] : memref<4x8x1xf32, #tpu.memory_space<vmem>>, vector<4x8x1xf32>
      %10 = tpu.reciprocal %9 {approx = true} : vector<4x8x1xf32> -> vector<4x8x1xf32>
      %c0_5 = arith.constant 0 : index
      %c0_6 = arith.constant 0 : index
      %c0_7 = arith.constant 0 : index
      %11 = vector.load %arg9[%c0_5, %c0_6, %c0_7] : memref<4x8x8xf32, #tpu.memory_space<vmem>>, vector<4x8x8xf32>
      %12 = vector.broadcast %10 : vector<4x8x1xf32> to vector<4x8x8xf32>
      %13 = arith.mulf %11, %12 : vector<4x8x8xf32>
      %14 = arith.truncf %13 : vector<4x8x8xf32> to vector<4x8x8xbf16>
      %c0_8 = arith.constant 0 : index
      %c0_9 = arith.constant 0 : index
      %c0_10 = arith.constant 0 : index
      %c0_11 = arith.constant 0 : index
      %15 = vector.load %arg6[%c0_8, %c0_9, %c0_10, %c0_11] : memref<1x4x8x8xbf16, #tpu.memory_space<vmem>>, vector<1x4x8x8xbf16>
      %16 = vector.shape_cast %15 : vector<1x4x8x8xbf16> to vector<4x8x8xbf16>
      %17 = vector.shape_cast %14 : vector<4x8x8xbf16> to vector<1x4x8x8xbf16>
      tpu.vector_store %arg6[%c0_8, %c0_9, %c0_10, %c0_11], %17 {strides = array<i32>} : memref<1x4x8x8xbf16, #tpu.memory_space<vmem>>, vector<1x4x8x8xbf16>,
    } else {
    }
    return
  }
  func.func @transform_0(%arg0: i32, %arg1: i32, %arg2: i32) -> (i32, i32, i32, i32) {
    %c0_i32 = arith.constant 0 : i32
    %c0_i32_0 = arith.constant 0 : i32
    %c0_i32_1 = arith.constant 0 : i32
    return %arg0, %c0_i32, %arg1, %c0_i32_0 : i32, i32, i32, i32
  }
  func.func @transform_1(%arg0: i32, %arg1: i32, %arg2: i32) -> (i32, i32, i32, i32) {
    %c0_i32 = arith.constant 0 : i32
    %c0_i32_0 = arith.constant 0 : i32
    %c0_i32_1 = arith.constant 0 : i32
    return %arg0, %c0_i32, %arg2, %c0_i32_0 : i32, i32, i32, i32
  }
  func.func @transform_2(%arg0: i32, %arg1: i32, %arg2: i32) -> (i32, i32, i32, i32) {
    %c0_i32 = arith.constant 0 : i32
    %c0_i32_0 = arith.constant 0 : i32
    %c0_i32_1 = arith.constant 0 : i32
    return %arg0, %c0_i32, %arg2, %c0_i32_0 : i32, i32, i32, i32
  }
  func.func @transform_3(%arg0: i32, %arg1: i32, %arg2: i32) -> (i32, i32, i32, i32) {
    %c0_i32 = arith.constant 0 : i32
    %c0_i32_0 = arith.constant 0 : i32
    %c0_i32_1 = arith.constant 0 : i32
    return %arg0, %c0_i32, %arg1, %c0_i32_0 : i32, i32, i32, i32
  }
}

module attributes {stable_mosaic.version = 11 : i64} {
  func.func @_linear_kernel(%arg0: i32, %arg1: memref<16x32xbf16, #tpu.memory_space<vmem>>, %arg2: memref<32x32xbf16, #tpu.memory_space<vmem>>, %arg3: memref<1x32xf32, #tpu.memory_space<vmem>>, %arg4: memref<16x32xf32, #tpu.memory_space<vmem>>) attributes {dimension_semantics = [#tpu.dimension_semantics<parallel>], iteration_bounds = array<i64: 1>, scalar_prefetch = 0 : i64, scratch_operands = 0 : i64, tpu.core_type = #tpu.core_type<tc>, window_params = [{transform_indices = @transform_0, window_bounds = array<i64: 16, 32>}, {pipeline_mode = #tpu.pipeline_mode<synchronous>, transform_indices = @transform_1, window_bounds = array<i64: 32, 32>}, {pipeline_mode = #tpu.pipeline_mode<synchronous>, transform_indices = @transform_2, window_bounds = array<i64: 1, 32>}, {transform_indices = @transform_3, window_bounds = array<i64: 16, 32>}]} {
    %c0 = arith.constant 0 : index
    %c0_0 = arith.constant 0 : index
    %0 = vector.load %arg1[%c0, %c0_0] : memref<16x32xbf16, #tpu.memory_space<vmem>>, vector<16x32xbf16>
    %c0_1 = arith.constant 0 : index
    %c0_2 = arith.constant 0 : index
    %1 = vector.load %arg2[%c0_1, %c0_2] : memref<32x32xbf16, #tpu.memory_space<vmem>>, vector<32x32xbf16>
    %cst = arith.constant dense<0.000000e+00> : vector<16x32xf32>
    %2 = tpu.matmul %0, %1, %cst {dimension_numbers = #tpu.dot_dimension_numbers<[1], [0], [0], [1], [0, 0, 1, 1], [], []>} : vector<16x32xbf16>, vector<32x32xbf16>, vector<16x32xf32> -> vector<16x32xf32>
    %c0_3 = arith.constant 0 : index
    %c0_4 = arith.constant 0 : index
    %3 = vector.load %arg3[%c0_3, %c0_4] : memref<1x32xf32, #tpu.memory_space<vmem>>, vector<1x32xf32>
    %4 = vector.broadcast %3 : vector<1x32xf32> to vector<16x32xf32>
    %5 = arith.addf %2, %4 : vector<16x32xf32>
    %c0_5 = arith.constant 0 : index
    %c0_6 = arith.constant 0 : index
    %6 = vector.load %arg4[%c0_5, %c0_6] : memref<16x32xf32, #tpu.memory_space<vmem>>, vector<16x32xf32>
    tpu.vector_store %arg4[%c0_5, %c0_6], %5 {strides = array<i32>} : memref<16x32xf32, #tpu.memory_space<vmem>>, vector<16x32xf32>,
    return
  }
  func.func @transform_0(%arg0: i32) -> (i32, i32) {
    %c0_i32 = arith.constant 0 : i32
    %c0_i32_0 = arith.constant 0 : i32
    return %arg0, %c0_i32 : i32, i32
  }
  func.func @transform_1(%arg0: i32) -> (i32, i32) {
    %c0_i32 = arith.constant 0 : i32
    %c0_i32_0 = arith.constant 0 : i32
    %c0_i32_1 = arith.constant 0 : i32
    return %c0_i32, %c0_i32_0 : i32, i32
  }
  func.func @transform_2(%arg0: i32) -> (i32, i32) {
    %c0_i32 = arith.constant 0 : i32
    %c0_i32_0 = arith.constant 0 : i32
    %c0_i32_1 = arith.constant 0 : i32
    return %c0_i32, %c0_i32_0 : i32, i32
  }
  func.func @transform_3(%arg0: i32) -> (i32, i32) {
    %c0_i32 = arith.constant 0 : i32
    %c0_i32_0 = arith.constant 0 : i32
    return %arg0, %c0_i32 : i32, i32
  }
}

</mosaic_0001>

<llo_original>
// kernel: causal_self_attention.3
$region0: #{causal_self_attention.3}
  #allocation0 [shape = 'u32[]', space=smem, size = 0x4, offset = 0x4, fixed_abs, tag = 'smem constant byte address 0x4 - core index']
  #allocation1 [shape = 'u32[144,128]{1,0:T(1,128)}', space=vmem, size = 0x12000, scoped, tag = 'internal scratch']
  %s0 = inlined_call_operand.vmem [shape: bf16[16,32], index: 0, kind: input, shape index: {}]
  %s1 = inlined_call_operand.vmem [shape: bf16[32,96], index: 1, kind: input, shape index: {}]
  %s2 = inlined_call_operand.vmem [shape: f32[1,96], index: 2, kind: input, shape index: {}]
  %s3 = inlined_call_operand.vmem [shape: bf16[16,96], index: 3, kind: output, shape index: {}]
  %s4 = sld [smem:[#allocation0]]
  $region22: #{causal_self_attention.3} parent=0
    _
  %s6 = ssub.s32 1, %s4
  %s7 = scalar_select 0, %s6, %s4
  // Predicated region
  $region2: #{causal_self_attention.3} parent=0 // pred_check
    _
  $region3: #{causal_self_attention.3} parent=0 // pred_check_branch
    %9 = sbr.rel (0) target = $region5
  $region4: #{causal_self_attention.3} parent=0 // pred_region
    _
  $region5: #{causal_self_attention.3} parent=0 // pred_fallthru
    _
  // Predicated region
  $region6: #{causal_self_attention.3} parent=0 // pred_check
    _
  $region7: #{causal_self_attention.3} parent=0 // pred_check_branch
    %11 = sbr.rel (0) target = $region9
  $region8: #{causal_self_attention.3} parent=0 // pred_region
    _
  $region9: #{causal_self_attention.3} parent=0 // pred_fallthru
    _
  // Predicated region
  $region10: #{causal_self_attention.3} parent=0 // pred_check
    _
  $region11: #{causal_self_attention.3} parent=0 // pred_check_branch
    %13 = sbr.rel (0) target = $region13
  $region12: #{causal_self_attention.3} parent=0 // pred_region
    _
  $region13: #{causal_self_attention.3} parent=0 // pred_fallthru
    _
  %v15 = vld [vmem:[%s0] sm:$0xf]
  %v16 = vld [vmem:[%s0 + $0x4] sm:$0xf]
  %v17 = vld [vmem:[%s1] sm:$0xf]
  %v18 = vld [vmem:[%s1 + $0x4] sm:$0xf]
  %v19 = vld [vmem:[%s1 + $0x8] sm:$0xf]
  %v20 = vld [vmem:[%s1 + $0xc] sm:$0xf]
  %v21 = vld [vmem:[%s2] sm:$0x1]
  %v23 = vlaneseq
  %v24 = vshrl.u32 %v23, 7
  %v25 = vsub.s32 0, %v24
  %v26 = vrot.slane %v21, %v25
  %v30 = vunpack.c.l.b16 %v15
  %v31 = vunpack.c.l.b16 %v16
  %v32 = vpack.c.b16 %v31, %v30
  %v37 = vunpack.c.l.b16 %v17
  %v38 = vunpack.c.l.b16 %v18
  %v39 = vunpack.c.l.b16 %v19
  %v40 = vunpack.c.l.b16 %v20
  %v41 = vpack.c.b16 %v38, %v37
  %v42 = vpack.c.b16 %v40, %v39
  %vm45 = vcmask 261120
  %v47 = vsel %vm45, %v32, 0
  %49 = vmatprep.subr.bf16.mxu0 0
  %50 = vmatpush1.bf16.msra.mxu0 %v41
  %51 = vmatprep.subr.bf16.mxu0 0
  %52 = vmatpush1.bf16.msra.mxu0 %v42
  %53 = vmatprep.subr.bf16.mxu0 0
  %54 = vmatpush1.bf16.msra.mxu0 0
  %55 = vmatprep.subr.bf16.mxu0 0
  %56 = vmatpush1.bf16.msra.mxu0 0
  %57 = vmatprep.subr.bf16.mxu0 0
  %58 = vmatpush1.bf16.msra.mxu0 0
  %59 = vmatprep.subr.bf16.mxu0 0
  %60 = vmatpush1.bf16.msra.mxu0 0
  %61 = vmatprep.subr.bf16.mxu0 0
  %62 = vmatpush1.bf16.msra.mxu0 0
  %63 = vmatprep.subr.bf16.mxu0 0
  %64 = vmatpush1.bf16.msra.mxu0 0
  %65 = vmatprep.subr.bf16.mxu0 0
  %66 = vmatpush1.bf16.msra.mxu0 0
  %67 = vmatprep.subr.bf16.mxu0 0
  %68 = vmatpush1.bf16.msra.mxu0 0
  %69 = vmatprep.subr.bf16.mxu0 0
  %70 = vmatpush1.bf16.msra.mxu0 0
  %71 = vmatprep.subr.bf16.mxu0 0
  %72 = vmatpush1.bf16.msra.mxu0 0
  %73 = vmatprep.subr.bf16.mxu0 0
  %74 = vmatpush1.bf16.msra.mxu0 0
  %75 = vmatprep.subr.bf16.mxu0 0
  %76 = vmatpush1.bf16.msra.mxu0 0
  %77 = vmatprep.subr.bf16.mxu0 0
  %78 = vmatpush1.bf16.msra.mxu0 0
  %79 = vmatprep.subr.bf16.mxu0 0
  %80 = vmatpush1.bf16.msra.mxu0 0
  %81 = vmatprep.mubr.bf16.mxu0 0
  %82 = vmatmul.mubr.bf16.gmra.mrb[0].mxu0 %v47
  %v83 = vpop.f32.mrb[0].mxu0
  %v84 = vadd.f32 %v26, %v83
  %v85 = vpop.f32.mrb[0].mxu0
  %v86 = vpop.f32.mrb[0].mxu0
  %v87 = vadd.f32 %v26, %v86
  %v88 = vpop.f32.mrb[0].mxu0
  %89 = vdwg.mxu0
  %v90 = vpack.c.bf16 %v87, %v84
  %v92 = vunpack.c.l.b16 %v90
  %v93 = vunpack.c.h.b16 %v90
  %v94 = vpack.c.b16 %v92, %v92
  %v95 = vpack.c.b16 %v93, %v93
  %vm98 = vcmask 781312
  %99 = vst.msk [vmem:[%s3] sm:$0xf] %vm98, %v94
  %100 = vst.msk [vmem:[%s3 + $0x4] sm:$0xf] %vm98, %v95
  // Predicated region
  $region14: #{causal_self_attention.3} parent=0 // pred_check
    _
  $region15: #{causal_self_attention.3} parent=0 // pred_check_branch
    %102 = sbr.rel (0) target = $region17
  $region16: #{causal_self_attention.3} parent=0 // pred_region
    _
  $region17: #{causal_self_attention.3} parent=0 // pred_fallthru
    _
  // Predicated region
  $region18: #{causal_self_attention.3} parent=0 // pred_check
    _
  $region19: #{causal_self_attention.3} parent=0 // pred_check_branch
    %104 = sbr.rel (0) target = $region21
  $region20: #{causal_self_attention.3} parent=0 // pred_region
    _
  $region21: #{causal_self_attention.3} parent=0 // pred_fallthru
    _

// kernel: causal_self_attention.5
$region0: #{causal_self_attention.5}
  #allocation0 [shape = 'u32[]', space=smem, size = 0x4, offset = 0x4, fixed_abs, tag = 'smem constant byte address 0x4 - core index']
  #allocation1 [shape = 'u32[144,128]{1,0:T(1,128)}', space=vmem, size = 0x12000, scoped, tag = 'internal scratch']
  %s0 = inlined_call_operand.vmem [shape: bf16[16,32], index: 0, kind: input, shape index: {}]
  %s1 = inlined_call_operand.vmem [shape: bf16[32,32], index: 1, kind: input, shape index: {}]
  %s2 = inlined_call_operand.vmem [shape: f32[1,32], index: 2, kind: input, shape index: {}]
  %s3 = inlined_call_operand.hbm [shape: f32[16,32], index: 3, kind: output, shape index: {}]
  %s4 = sld [smem:[#allocation0]]
  $region22: #{causal_self_attention.5} parent=0
    _
  %s6 = ssub.s32 1, %s4
  %s7 = scalar_select 0, %s6, %s4
  $region1: #{causal_self_attention.5} parent=0
    #allocation2 [shape = 'u8[8192]{0}', space=vmem, size = 0x2000, scoped, tag = 'output window, operand 0, single buffered']
    #allocation3 [shape = 's32[1]{0}', space=sflag, size = 0x4, scoped, tag = 'scoped memory for causal_self_attention.5']
    %8 = vsyncpa [#allocation3], 0
    // Predicated region
    $region2: #{causal_self_attention.5} parent=1 // pred_check
      _
    $region3: #{causal_self_attention.5} parent=1 // pred_check_branch
      %10 = sbr.rel (0) target = $region5
    $region4: #{causal_self_attention.5} parent=1 // pred_region
      _
    $region5: #{causal_self_attention.5} parent=1 // pred_fallthru
      _
    // Predicated region
    $region6: #{causal_self_attention.5} parent=1 // pred_check
      _
    $region7: #{causal_self_attention.5} parent=1 // pred_check_branch
      %12 = sbr.rel (0) target = $region9
    $region8: #{causal_self_attention.5} parent=1 // pred_region
      _
    $region9: #{causal_self_attention.5} parent=1 // pred_fallthru
      _
    // Predicated region
    $region10: #{causal_self_attention.5} parent=1 // pred_check
      _
    $region11: #{causal_self_attention.5} parent=1 // pred_check_branch
      %14 = sbr.rel (0) target = $region13
    $region12: #{causal_self_attention.5} parent=1 // pred_region
      _
    $region13: #{causal_self_attention.5} parent=1 // pred_fallthru
      _
    %v16 = vld [vmem:[%s0] sm:$0xf]
    %v17 = vld [vmem:[%s0 + $0x4] sm:$0xf]
    %v18 = vld [vmem:[%s1] sm:$0xf]
    %v19 = vld [vmem:[%s1 + $0x4] sm:$0xf]
    %v20 = vld [vmem:[%s1 + $0x8] sm:$0xf]
    %v21 = vld [vmem:[%s1 + $0xc] sm:$0xf]
    %v22 = vld [vmem:[%s2] sm:$0x1]
    %v24 = vlaneseq
    %v25 = vshrl.u32 %v24, 7
    %v26 = vsub.s32 0, %v25
    %v27 = vrot.slane %v22, %v26
    %v31 = vunpack.c.l.b16 %v16
    %v32 = vunpack.c.l.b16 %v17
    %v33 = vpack.c.b16 %v32, %v31
    %v38 = vunpack.c.l.b16 %v18
    %v39 = vunpack.c.l.b16 %v19
    %v40 = vunpack.c.l.b16 %v20
    %v41 = vunpack.c.l.b16 %v21
    %v42 = vpack.c.b16 %v39, %v38
    %v43 = vpack.c.b16 %v41, %v40
    %vm46 = vcmask 261120
    %v48 = vsel %vm46, %v33, 0
    %50 = vmatprep.subr.bf16.mxu0 0
    %51 = vmatpush1.bf16.msra.mxu0 %v42
    %52 = vmatprep.subr.bf16.mxu0 0
    %53 = vmatpush1.bf16.msra.mxu0 %v43
    %54 = vmatprep.subr.bf16.mxu0 0
    %55 = vmatpush1.bf16.msra.mxu0 0
    %56 = vmatprep.subr.bf16.mxu0 0
    %57 = vmatpush1.bf16.msra.mxu0 0
    %58 = vmatprep.subr.bf16.mxu0 0
    %59 = vmatpush1.bf16.msra.mxu0 0
    %60 = vmatprep.subr.bf16.mxu0 0
    %61 = vmatpush1.bf16.msra.mxu0 0
    %62 = vmatprep.subr.bf16.mxu0 0
    %63 = vmatpush1.bf16.msra.mxu0 0
    %64 = vmatprep.subr.bf16.mxu0 0
    %65 = vmatpush1.bf16.msra.mxu0 0
    %66 = vmatprep.subr.bf16.mxu0 0
    %67 = vmatpush1.bf16.msra.mxu0 0
    %68 = vmatprep.subr.bf16.mxu0 0
    %69 = vmatpush1.bf16.msra.mxu0 0
    %70 = vmatprep.subr.bf16.mxu0 0
    %71 = vmatpush1.bf16.msra.mxu0 0
    %72 = vmatprep.subr.bf16.mxu0 0
    %73 = vmatpush1.bf16.msra.mxu0 0
    %74 = vmatprep.subr.bf16.mxu0 0
    %75 = vmatpush1.bf16.msra.mxu0 0
    %76 = vmatprep.subr.bf16.mxu0 0
    %77 = vmatpush1.bf16.msra.mxu0 0
    %78 = vmatprep.subr.bf16.mxu0 0
    %79 = vmatpush1.bf16.msra.mxu0 0
    %80 = vmatprep.subr.bf16.mxu0 0
    %81 = vmatpush1.bf16.msra.mxu0 0
    %82 = vmatprep.mubr.bf16.mxu0 0
    %83 = vmatmul.mubr.bf16.gmra.mrb[0].mxu0 %v48
    %v84 = vpop.f32.mrb[0].mxu0
    %v85 = vadd.f32 %v27, %v84
    %v86 = vpop.f32.mrb[0].mxu0
    %v87 = vpop.f32.mrb[0].mxu0
    %v88 = vadd.f32 %v27, %v87
    %v89 = vpop.f32.mrb[0].mxu0
    %90 = vdwg.mxu0
    %91 = vst.msk [vmem:[#allocation2] sm:$0xff] %vm46, %v85
    %92 = vst.msk [vmem:[#allocation2 + $0x8] sm:$0xff] %vm46, %v88
    // Predicated region
    $region14: #{causal_self_attention.5} parent=1 // pred_check
      _
    $region15: #{causal_self_attention.5} parent=1 // pred_check_branch
      %94 = sbr.rel (0) target = $region17
    $region16: #{causal_self_attention.5} parent=1 // pred_region
      %s96 = ssub.s32 256, 256
      %97 = vsyncadd [#allocation3], %s96
      %s98 = sshll.u32 [#allocation2], 4
      %s99 = int_to_ptr.vmem [resolvable:$true] %s98
      %104 = dma.vmem_to_hbm [thread:$0]  %s99, 256, %s3, [#allocation3], 128, 128, 8
    $region17: #{causal_self_attention.5} parent=1 // pred_fallthru
      _
    // Predicated region
    $region18: #{causal_self_attention.5} parent=1 // pred_check
      _
    $region19: #{causal_self_attention.5} parent=1 // pred_check_branch
      %106 = sbr.rel (0) target = $region21
    $region20: #{causal_self_attention.5} parent=1 // pred_region
      %107 = dma.done [#allocation3], 256
    $region21: #{causal_self_attention.5} parent=1 // pred_fallthru
      _
    %108 = vsyncpa [#allocation3], 1

// kernel: causal_self_attention.4
$region0: #{causal_self_attention.4}
  #allocation0 [shape = 'u32[]', space=smem, size = 0x4, offset = 0x4, fixed_abs, tag = 'smem constant byte address 0x4 - core index']
  #allocation1 [shape = 'u32[144,128]{1,0:T(1,128)}', space=vmem, size = 0x12000, scoped, tag = 'internal scratch']
  #allocation2 [shape = 'f32[4,8,1]{2,1,0:T(8,128)}', space=vmem, size = 0x4000, scoped, tag = 'scratch operand']
  #allocation3 [shape = 'f32[4,8,1]{2,1,0:T(8,128)}', space=vmem, size = 0x4000, scoped, tag = 'scratch operand']
  #allocation4 [shape = 'f32[4,8,8]{2,1,0:T(8,128)}', space=vmem, size = 0x4000, scoped, tag = 'scratch operand']
  %s0 = inlined_call_operand.vmem [shape: bf16[2,4,8,8], index: 0, kind: input, shape index: {}]
  %s1 = inlined_call_operand.vmem [shape: bf16[2,4,8,8], index: 1, kind: input, shape index: {}]
  %s2 = inlined_call_operand.vmem [shape: bf16[2,4,8,8], index: 2, kind: input, shape index: {}]
  %s3 = inlined_call_operand.vmem [shape: bf16[2,4,8,8], index: 3, kind: output, shape index: {}]
  %s4 = sld [smem:[#allocation0]]
  $region57: #{causal_self_attention.4} parent=0
    _
  %s6 = ssub.s32 1, %s4
  %s7 = scalar_select 0, %s6, %s4
  loop: start=0, step=1, limit=4
  $region2: #{causal_self_attention.4} parent=0 // loop_pre_header
    _
  $region3: #{causal_self_attention.4} parent=0 // loop_header
    %s9 = sphi 0, %s13
    %p10 = scmp.ge.s32.totalorder %s9, 4
    %s16 = sphi 0, %s35
    %s17 = sphi 0, %s31
    %s18 = sphi 0, %s27
    %s19 = sphi 0, %s16
    %s20 = sphi 0, %s17
    %s21 = sphi 0, %s18
    %s22 = sphi 0, %s19
    %s23 = sphi 0, %s20
    %s24 = sphi 0, %s21
    %s40 = sphi 0, %s42
    %s43 = sphi 0, %s40
    %s44 = sphi 0, %s43
    %s60 = sphi 0, %s44
    %s68 = sphi 0, %s70
    %s71 = sphi 0, %s68
    %s72 = sphi 0, %s71
    %s88 = sphi 0, %s72
    %s96 = sphi 0, %s98
    %s99 = sphi 0, %s96
    %s100 = sphi 0, %s99
    %s116 = sphi 0, %s100
    %s124 = sphi 0, %s126
    %s127 = sphi 0, %s124
    %s128 = sphi 0, %s127
    %s144 = sphi 0, %s128
  $region4: #{causal_self_attention.4} parent=0 // loop_header_branch
    %12 = sbr.rel (%p10) target = $region8
  $region5: #{causal_self_attention.4} parent=0 // loop_body
    %s14 = ssub.s32 %s9, 1
    %s15 = ssub.s32 %s9, 2
    %s25 = sadd.s32 1, %s18
    %p26 = scmp.ge.s32.totalorder %s25, 1
    %s27 = scalar_select %p26, 0, %s25
    %s28 = sadd.s32 1, %s17
    %s29 = scalar_select %p26, %s28, %s17
    %p30 = scmp.ge.s32.totalorder %s29, 1
    %s31 = scalar_select %p30, 0, %s29
    %s32 = sadd.s32 1, %s16
    %s33 = scalar_select %p30, %s32, %s16
    %p34 = scmp.ge.s32.totalorder %s33, 2
    %s35 = scalar_select %p34, 0, %s33
    %s36 = ssub.s32 %s16, %s35
    %s37 = ssub.s32 %s17, %s31
    %s38 = sor.u32 %s36, %s37
    %p39 = scmp.eq.s32.totalorder %s38, 0
    %s41 = sadd.s32 %s40, 1
    %s42 = scalar_select %p39, %s40, %s41
    %p45 = pneg %p39
    %p46 = scmp.eq.s32.totalorder %s9, 1
    %p47 = por %p45, %p46
    %p48 = scmp.ne.s32.totalorder %s40, %s43
    %p49 = scmp.eq.s32.totalorder %s9, 0
    %p50 = por %p48, %p49
    %p51 = scmp.ne.s32.totalorder %s40, %s43
    %p52 = scmp.eq.s32.totalorder %s14, 1
    %p53 = por %p51, %p52
    %p54 = scmp.ne.s32.totalorder %s43, %s44
    %p55 = scmp.eq.s32.totalorder %s14, 0
    %p56 = por %p54, %p55
    %p57 = scmp.ne.s32.totalorder %s43, %s44
    %p58 = scmp.eq.s32.totalorder %s15, 1
    %p59 = por %p57, %p58
    %p61 = scmp.ne.s32.totalorder %s44, %s60
    %p62 = scmp.eq.s32.totalorder %s15, 0
    %p63 = por %p61, %p62
    %s64 = ssub.s32 %s16, %s35
    %s65 = ssub.s32 %s18, %s27
    %s66 = sor.u32 %s64, %s65
    %p67 = scmp.eq.s32.totalorder %s66, 0
    %s69 = sadd.s32 %s68, 1
    %s70 = scalar_select %p67, %s68, %s69
    %p73 = pneg %p67
    %p74 = scmp.eq.s32.totalorder %s9, 1
    %p75 = por %p73, %p74
    %p76 = scmp.ne.s32.totalorder %s68, %s71
    %p77 = scmp.eq.s32.totalorder %s9, 0
    %p78 = por %p76, %p77
    %p79 = scmp.ne.s32.totalorder %s68, %s71
    %p80 = scmp.eq.s32.totalorder %s14, 1
    %p81 = por %p79, %p80
    %p82 = scmp.ne.s32.totalorder %s71, %s72
    %p83 = scmp.eq.s32.totalorder %s14, 0
    %p84 = por %p82, %p83
    %p85 = scmp.ne.s32.totalorder %s71, %s72
    %p86 = scmp.eq.s32.totalorder %s15, 1
    %p87 = por %p85, %p86
    %p89 = scmp.ne.s32.totalorder %s72, %s88
    %p90 = scmp.eq.s32.totalorder %s15, 0
    %p91 = por %p89, %p90
    %s92 = ssub.s32 %s16, %s35
    %s93 = ssub.s32 %s18, %s27
    %s94 = sor.u32 %s92, %s93
    %p95 = scmp.eq.s32.totalorder %s94, 0
    %s97 = sadd.s32 %s96, 1
    %s98 = scalar_select %p95, %s96, %s97
    %p101 = pneg %p95
    %p102 = scmp.eq.s32.totalorder %s9, 1
    %p103 = por %p101, %p102
    %p104 = scmp.ne.s32.totalorder %s96, %s99
    %p105 = scmp.eq.s32.totalorder %s9, 0
    %p106 = por %p104, %p105
    %p107 = scmp.ne.s32.totalorder %s96, %s99
    %p108 = scmp.eq.s32.totalorder %s14, 1
    %p109 = por %p107, %p108
    %p110 = scmp.ne.s32.totalorder %s99, %s100
    %p111 = scmp.eq.s32.totalorder %s14, 0
    %p112 = por %p110, %p111
    %p113 = scmp.ne.s32.totalorder %s99, %s100
    %p114 = scmp.eq.s32.totalorder %s15, 1
    %p115 = por %p113, %p114
    %p117 = scmp.ne.s32.totalorder %s100, %s116
    %p118 = scmp.eq.s32.totalorder %s15, 0
    %p119 = por %p117, %p118
    %s120 = ssub.s32 %s16, %s35
    %s121 = ssub.s32 %s17, %s31
    %s122 = sor.u32 %s120, %s121
    %p123 = scmp.eq.s32.totalorder %s122, 0
    %s125 = sadd.s32 %s124, 1
    %s126 = scalar_select %p123, %s124, %s125
    %p129 = pneg %p123
    %p130 = scmp.eq.s32.totalorder %s9, 1
    %p131 = por %p129, %p130
    %p132 = scmp.ne.s32.totalorder %s124, %s127
    %p133 = scmp.eq.s32.totalorder %s9, 0
    %p134 = por %p132, %p133
    %p135 = scmp.ne.s32.totalorder %s124, %s127
    %p136 = scmp.eq.s32.totalorder %s14, 1
    %p137 = por %p135, %p136
    %p138 = scmp.ne.s32.totalorder %s127, %s128
    %p139 = scmp.eq.s32.totalorder %s14, 0
    %p140 = por %p138, %p139
    %p141 = scmp.ne.s32.totalorder %s127, %s128
    %p142 = scmp.eq.s32.totalorder %s15, 1
    %p143 = por %p141, %p142
    %p145 = scmp.ne.s32.totalorder %s128, %s144
    %p146 = scmp.eq.s32.totalorder %s15, 0
    %p147 = por %p145, %p146
    %p148 = scmp.le.s32.totalorder 1, %s9
    %p149 = scmp.lt.s32.totalorder %s9, 3
    %p150 = pnand %p148, %p149
    %p151 = pneg %p150
    // Predicated region
    $region9: #{causal_self_attention.4} parent=5 // pred_check
      _
    $region10: #{causal_self_attention.4} parent=5 // pred_check_branch
      %153 = sbr.rel (%p150) target = $region12
    $region11: #{causal_self_attention.4} parent=5 // pred_region
      %s154 = ssub.s32 %s9, 1
    $region12: #{causal_self_attention.4} parent=5 // pred_fallthru
      _
    %p155 = scmp.lt.s32.totalorder %s9, 2
    // Predicated region
    $region13: #{causal_self_attention.4} parent=5 // pred_check
      %p156 = pneg %p155
    $region14: #{causal_self_attention.4} parent=5 // pred_check_branch
      %158 = sbr.rel (%p156) target = $region16
    $region15: #{causal_self_attention.4} parent=5 // pred_region
      // Predicated region
      $region17: #{causal_self_attention.4} parent=15 // pred_check
        %p159 = pneg %p50
      $region18: #{causal_self_attention.4} parent=15 // pred_check_branch
        %161 = sbr.rel (%p159) target = $region20
      $region19: #{causal_self_attention.4} parent=15 // pred_region
        %p162 = scmp.lt.s32.totalorder %s16, 1
        %s163 = scalar_select %p162, %s16, 1
        %p164 = scmp.lt.s32.totalorder %s17, 0
        %s165 = scalar_select %p164, %s17, 0
        %s166 = smul.addr %s163, 4
        %s167 = sadd.s32 %s165, %s166
        %s168 = smul.addr %s167, 4
        %s169 = scalar_lea.vmem %s0, %s168
      $region20: #{causal_self_attention.4} parent=15 // pred_fallthru
        _
      // Predicated region
      $region21: #{causal_self_attention.4} parent=15 // pred_check
        %p170 = pneg %p78
      $region22: #{causal_self_attention.4} parent=15 // pred_check_branch
        %172 = sbr.rel (%p170) target = $region24
      $region23: #{causal_self_attention.4} parent=15 // pred_region
        %p173 = scmp.lt.s32.totalorder %s16, 1
        %s174 = scalar_select %p173, %s16, 1
        %p175 = scmp.lt.s32.totalorder %s18, 0
        %s176 = scalar_select %p175, %s18, 0
        %s177 = smul.addr %s174, 4
        %s178 = sadd.s32 %s176, %s177
        %s179 = smul.addr %s178, 4
        %s180 = scalar_lea.vmem %s1, %s179
      $region24: #{causal_self_attention.4} parent=15 // pred_fallthru
        _
      // Predicated region
      $region25: #{causal_self_attention.4} parent=15 // pred_check
        %p181 = pneg %p106
      $region26: #{causal_self_attention.4} parent=15 // pred_check_branch
        %183 = sbr.rel (%p181) target = $region28
      $region27: #{causal_self_attention.4} parent=15 // pred_region
        %p184 = scmp.lt.s32.totalorder %s16, 1
        %s185 = scalar_select %p184, %s16, 1
        %p186 = scmp.lt.s32.totalorder %s18, 0
        %s187 = scalar_select %p186, %s18, 0
        %s188 = smul.addr %s185, 4
        %s189 = sadd.s32 %s187, %s188
        %s190 = smul.addr %s189, 4
        %s191 = scalar_lea.vmem %s2, %s190
      $region28: #{causal_self_attention.4} parent=15 // pred_fallthru
        _
    $region16: #{causal_self_attention.4} parent=5 // pred_fallthru
      _
    %p192 = scmp.le.s32.totalorder 1, %s9
    %p193 = scmp.lt.s32.totalorder %s9, 3
    %p194 = pnand %p192, %p193
    %p195 = pneg %p194
    // Predicated region
    $region29: #{causal_self_attention.4} parent=5 // pred_check
      _
    $region30: #{causal_self_attention.4} parent=5 // pred_check_branch
      %197 = sbr.rel (%p194) target = $region32
    $region31: #{causal_self_attention.4} parent=5 // pred_region
      %s198 = ssub.s32 %s9, 1
      %p199 = scmp.lt.s32.totalorder %s19, 1
      %s200 = scalar_select %p199, %s19, 1
      %p201 = scmp.lt.s32.totalorder %s20, 0
      %s202 = scalar_select %p201, %s20, 0
      %s203 = smul.addr %s200, 4
      %s204 = sadd.s32 %s202, %s203
      %s205 = smul.addr %s204, 4
      %s206 = scalar_lea.vmem %s0, %s205
      %p207 = pneg %p56
      %p208 = pneg %p53
      %p209 = scmp.lt.s32.totalorder %s19, 1
      %s210 = scalar_select %p209, %s19, 1
      %p211 = scmp.lt.s32.totalorder %s21, 0
      %s212 = scalar_select %p211, %s21, 0
      %s213 = smul.addr %s210, 4
      %s214 = sadd.s32 %s212, %s213
      %s215 = smul.addr %s214, 4
      %s216 = scalar_lea.vmem %s1, %s215
      %p217 = pneg %p84
      %p218 = pneg %p81
      %p219 = scmp.lt.s32.totalorder %s19, 1
      %s220 = scalar_select %p219, %s19, 1
      %p221 = scmp.lt.s32.totalorder %s21, 0
      %s222 = scalar_select %p221, %s21, 0
      %s223 = smul.addr %s220, 4
      %s224 = sadd.s32 %s222, %s223
      %s225 = smul.addr %s224, 4
      %s226 = scalar_lea.vmem %s2, %s225
      %p227 = pneg %p112
      %p228 = pneg %p109
      %p229 = pneg %p140
      %p230 = pneg %p137
      %p231 = scmp.lt.s32.totalorder %s19, 1
      %s232 = scalar_select %p231, %s19, 1
      %p233 = scmp.lt.s32.totalorder %s20, 0
      %s234 = scalar_select %p233, %s20, 0
      %s235 = smul.addr %s232, 4
      %s236 = sadd.s32 %s234, %s235
      %s237 = smul.addr %s236, 4
      %s238 = scalar_lea.vmem %s3, %s237
      %p239 = scmp.lt.s32.totalorder %s19, 1
      %s240 = scalar_select %p239, %s19, 1
      %p241 = scmp.lt.s32.totalorder %s20, 0
      %s242 = scalar_select %p241, %s20, 0
      %s243 = smul.addr %s240, 4
      %s244 = sadd.s32 %s242, %s243
      %s245 = smul.addr %s244, 4
      %s246 = scalar_lea.vmem %s0, %s245
      %p247 = scmp.lt.s32.totalorder %s19, 1
      %s248 = scalar_select %p247, %s19, 1
      %p249 = scmp.lt.s32.totalorder %s21, 0
      %s250 = scalar_select %p249, %s21, 0
      %s251 = smul.addr %s248, 4
      %s252 = sadd.s32 %s250, %s251
      %s253 = smul.addr %s252, 4
      %s254 = scalar_lea.vmem %s1, %s253
      %p255 = scmp.lt.s32.totalorder %s19, 1
      %s256 = scalar_select %p255, %s19, 1
      %p257 = scmp.lt.s32.totalorder %s21, 0
      %s258 = scalar_select %p257, %s21, 0
      %s259 = smul.addr %s256, 4
      %s260 = sadd.s32 %s258, %s259
      %s261 = smul.addr %s260, 4
      %s262 = scalar_lea.vmem %s2, %s261
      %p263 = scmp.lt.s32.totalorder %s19, 1
      %s264 = scalar_select %p263, %s19, 1
      %p265 = scmp.lt.s32.totalorder %s20, 0
      %s266 = scalar_select %p265, %s20, 0
      %s267 = smul.addr %s264, 4
      %s268 = sadd.s32 %s266, %s267
      %s269 = smul.addr %s268, 4
      %s270 = scalar_lea.vmem %s3, %s269
      %p273 = scmp.eq.s32.totalorder %s21, 0
      // Predicated region
      $region33: #{causal_self_attention.4} parent=31 // pred_check
        %p274 = pneg %p273
      $region34: #{causal_self_attention.4} parent=31 // pred_check_branch
        %276 = sbr.rel (%p274) target = $region36
      $region35: #{causal_self_attention.4} parent=31 // pred_region
        %vm277 = vcmask 7168
        %278 = vst.msk [vmem:[#allocation2] sm:$0xff] %vm277, -1e+30
        %279 = vst.msk [vmem:[#allocation2 + $0x8] sm:$0xff] %vm277, -1e+30
        %280 = vst.msk [vmem:[#allocation2 + $0x10] sm:$0xff] %vm277, -1e+30
        %281 = vst.msk [vmem:[#allocation2 + $0x18] sm:$0xff] %vm277, -1e+30
        %282 = vst.msk [vmem:[#allocation3] sm:$0xff] %vm277, 0.0
        %283 = vst.msk [vmem:[#allocation3 + $0x8] sm:$0xff] %vm277, 0.0
        %284 = vst.msk [vmem:[#allocation3 + $0x10] sm:$0xff] %vm277, 0.0
        %285 = vst.msk [vmem:[#allocation3 + $0x18] sm:$0xff] %vm277, 0.0
        %vm286 = vcmask 64512
        %287 = vst.msk [vmem:[#allocation4] sm:$0xff] %vm286, 0.0
        %288 = vst.msk [vmem:[#allocation4 + $0x8] sm:$0xff] %vm286, 0.0
        %289 = vst.msk [vmem:[#allocation4 + $0x10] sm:$0xff] %vm286, 0.0
        %290 = vst.msk [vmem:[#allocation4 + $0x18] sm:$0xff] %vm286, 0.0
      $region36: #{causal_self_attention.4} parent=31 // pred_fallthru
        _
      %p291 = scmp.le.s32.totalorder %s21, %s20
      // Predicated region
      $region37: #{causal_self_attention.4} parent=31 // pred_check
        %p292 = pneg %p291
      $region38: #{causal_self_attention.4} parent=31 // pred_check_branch
        %294 = sbr.rel (%p292) target = $region40
      $region39: #{causal_self_attention.4} parent=31 // pred_region
        %v295 = vld [vmem:[%s246] sm:$0xf]
        %v296 = vld [vmem:[%s246 + $0x4] sm:$0xf]
        %v297 = vld [vmem:[%s246 + $0x8] sm:$0xf]
        %v298 = vld [vmem:[%s246 + $0xc] sm:$0xf]
        %v299 = vmul.bf16 %v295, 1052065461
        %v300 = vmul.bf16 %v296, 1052065461
        %v301 = vmul.bf16 %v297, 1052065461
        %v302 = vmul.bf16 %v298, 1052065461
        %v303 = vld [vmem:[%s254] sm:$0xf]
        %v304 = vld [vmem:[%s254 + $0x4] sm:$0xf]
        %v305 = vld [vmem:[%s254 + $0x8] sm:$0xf]
        %v306 = vld [vmem:[%s254 + $0xc] sm:$0xf]
        %v307 = vld [vmem:[%s262] sm:$0xf]
        %v308 = vld [vmem:[%s262 + $0x4] sm:$0xf]
        %v309 = vld [vmem:[%s262 + $0x8] sm:$0xf]
        %v310 = vld [vmem:[%s262 + $0xc] sm:$0xf]
        %vm311 = vcmask 64512
        %v313 = vsel %vm311, %v299, 0
        %v316 = vsel %vm311, %v303, 0
        %318 = vmatprep.subr.bf16.mxu0 0
        %319 = vmatpush1.bf16.xpose.msra.mxu0 %v316
        %320 = vmatprep.subr.bf16.mxu0 0
        %321 = vmatpush1.bf16.xpose.msra.mxu0 0
        %322 = vmatprep.subr.bf16.mxu0 0
        %323 = vmatpush1.bf16.xpose.msra.mxu0 0
        %324 = vmatprep.subr.bf16.mxu0 0
        %325 = vmatpush1.bf16.xpose.msra.mxu0 0
        %326 = vmatprep.subr.bf16.mxu0 0
        %327 = vmatpush1.bf16.xpose.msra.mxu0 0
        %328 = vmatprep.subr.bf16.mxu0 0
        %329 = vmatpush1.bf16.xpose.msra.mxu0 0
        %330 = vmatprep.subr.bf16.mxu0 0
        %331 = vmatpush1.bf16.xpose.msra.mxu0 0
        %332 = vmatprep.subr.bf16.mxu0 0
        %333 = vmatpush1.bf16.xpose.msra.mxu0 0
        %334 = vmatprep.subr.bf16.mxu0 0
        %335 = vmatpush1.bf16.xpose.msra.mxu0 0
        %336 = vmatprep.subr.bf16.mxu0 0
        %337 = vmatpush1.bf16.xpose.msra.mxu0 0
        %338 = vmatprep.subr.bf16.mxu0 0
        %339 = vmatpush1.bf16.xpose.msra.mxu0 0
        %340 = vmatprep.subr.bf16.mxu0 0
        %341 = vmatpush1.bf16.xpose.msra.mxu0 0
        %342 = vmatprep.subr.bf16.mxu0 0
        %343 = vmatpush1.bf16.xpose.msra.mxu0 0
        %344 = vmatprep.subr.bf16.mxu0 0
        %345 = vmatpush1.bf16.xpose.msra.mxu0 0
        %346 = vmatprep.subr.bf16.mxu0 0
        %347 = vmatpush1.bf16.xpose.msra.mxu0 0
        %348 = vmatprep.subr.bf16.mxu0 0
        %349 = vmatpush1.bf16.xpose.msra.mxu0 0
        %350 = vmatprep.mubr.bf16.mxu0 0
        %351 = vmatmul.mubr.bf16.gmra.mrb[0].mxu0 %v313
        %v352 = vpop.f32.mrb[0].mxu0
        %v353 = vadd.f32 0.0, %v352
        %v354 = vpop.f32.mrb[0].mxu0
        %v355 = vpop.f32.mrb[0].mxu0
        %v356 = vpop.f32.mrb[0].mxu0
        %357 = vdwg.mxu0
        %v359 = vsel %vm311, %v300, 0
        %v362 = vsel %vm311, %v304, 0
        %364 = vmatprep.subr.bf16.mxu0 0
        %365 = vmatpush1.bf16.xpose.msra.mxu0 %v362
        %366 = vmatprep.subr.bf16.mxu0 0
        %367 = vmatpush1.bf16.xpose.msra.mxu0 0
        %368 = vmatprep.subr.bf16.mxu0 0
        %369 = vmatpush1.bf16.xpose.msra.mxu0 0
        %370 = vmatprep.subr.bf16.mxu0 0
        %371 = vmatpush1.bf16.xpose.msra.mxu0 0
        %372 = vmatprep.subr.bf16.mxu0 0
        %373 = vmatpush1.bf16.xpose.msra.mxu0 0
        %374 = vmatprep.subr.bf16.mxu0 0
        %375 = vmatpush1.bf16.xpose.msra.mxu0 0
        %376 = vmatprep.subr.bf16.mxu0 0
        %377 = vmatpush1.bf16.xpose.msra.mxu0 0
        %378 = vmatprep.subr.bf16.mxu0 0
        %379 = vmatpush1.bf16.xpose.msra.mxu0 0
        %380 = vmatprep.subr.bf16.mxu0 0
        %381 = vmatpush1.bf16.xpose.msra.mxu0 0
        %382 = vmatprep.subr.bf16.mxu0 0
        %383 = vmatpush1.bf16.xpose.msra.mxu0 0
        %384 = vmatprep.subr.bf16.mxu0 0
        %385 = vmatpush1.bf16.xpose.msra.mxu0 0
        %386 = vmatprep.subr.bf16.mxu0 0
        %387 = vmatpush1.bf16.xpose.msra.mxu0 0
        %388 = vmatprep.subr.bf16.mxu0 0
        %389 = vmatpush1.bf16.xpose.msra.mxu0 0
        %390 = vmatprep.subr.bf16.mxu0 0
        %391 = vmatpush1.bf16.xpose.msra.mxu0 0
        %392 = vmatprep.subr.bf16.mxu0 0
        %393 = vmatpush1.bf16.xpose.msra.mxu0 0
        %394 = vmatprep.subr.bf16.mxu0 0
        %395 = vmatpush1.bf16.xpose.msra.mxu0 0
        %396 = vmatprep.mubr.bf16.mxu0 0
        %397 = vmatmul.mubr.bf16.gmra.mrb[0].mxu0 %v359
        %v398 = vpop.f32.mrb[0].mxu0
        %v399 = vadd.f32 0.0, %v398
        %v400 = vpop.f32.mrb[0].mxu0
        %v401 = vpop.f32.mrb[0].mxu0
        %v402 = vpop.f32.mrb[0].mxu0
        %403 = vdwg.mxu0
        %v405 = vsel %vm311, %v301, 0
        %v408 = vsel %vm311, %v305, 0
        %410 = vmatprep.subr.bf16.mxu0 0
        %411 = vmatpush1.bf16.xpose.msra.mxu0 %v408
        %412 = vmatprep.subr.bf16.mxu0 0
        %413 = vmatpush1.bf16.xpose.msra.mxu0 0
        %414 = vmatprep.subr.bf16.mxu0 0
        %415 = vmatpush1.bf16.xpose.msra.mxu0 0
        %416 = vmatprep.subr.bf16.mxu0 0
        %417 = vmatpush1.bf16.xpose.msra.mxu0 0
        %418 = vmatprep.subr.bf16.mxu0 0
        %419 = vmatpush1.bf16.xpose.msra.mxu0 0
        %420 = vmatprep.subr.bf16.mxu0 0
        %421 = vmatpush1.bf16.xpose.msra.mxu0 0
        %422 = vmatprep.subr.bf16.mxu0 0
        %423 = vmatpush1.bf16.xpose.msra.mxu0 0
        %424 = vmatprep.subr.bf16.mxu0 0
        %425 = vmatpush1.bf16.xpose.msra.mxu0 0
        %426 = vmatprep.subr.bf16.mxu0 0
        %427 = vmatpush1.bf16.xpose.msra.mxu0 0
        %428 = vmatprep.subr.bf16.mxu0 0
        %429 = vmatpush1.bf16.xpose.msra.mxu0 0
        %430 = vmatprep.subr.bf16.mxu0 0
        %431 = vmatpush1.bf16.xpose.msra.mxu0 0
        %432 = vmatprep.subr.bf16.mxu0 0
        %433 = vmatpush1.bf16.xpose.msra.mxu0 0
        %434 = vmatprep.subr.bf16.mxu0 0
        %435 = vmatpush1.bf16.xpose.msra.mxu0 0
        %436 = vmatprep.subr.bf16.mxu0 0
        %437 = vmatpush1.bf16.xpose.msra.mxu0 0
        %438 = vmatprep.subr.bf16.mxu0 0
        %439 = vmatpush1.bf16.xpose.msra.mxu0 0
        %440 = vmatprep.subr.bf16.mxu0 0
        %441 = vmatpush1.bf16.xpose.msra.mxu0 0
        %442 = vmatprep.mubr.bf16.mxu0 0
        %443 = vmatmul.mubr.bf16.gmra.mrb[0].mxu0 %v405
        %v444 = vpop.f32.mrb[0].mxu0
        %v445 = vadd.f32 0.0, %v444
        %v446 = vpop.f32.mrb[0].mxu0
        %v447 = vpop.f32.mrb[0].mxu0
        %v448 = vpop.f32.mrb[0].mxu0
        %449 = vdwg.mxu0
        %v451 = vsel %vm311, %v302, 0
        %v454 = vsel %vm311, %v306, 0
        %456 = vmatprep.subr.bf16.mxu0 0
        %457 = vmatpush1.bf16.xpose.msra.mxu0 %v454
        %458 = vmatprep.subr.bf16.mxu0 0
        %459 = vmatpush1.bf16.xpose.msra.mxu0 0
        %460 = vmatprep.subr.bf16.mxu0 0
        %461 = vmatpush1.bf16.xpose.msra.mxu0 0
        %462 = vmatprep.subr.bf16.mxu0 0
        %463 = vmatpush1.bf16.xpose.msra.mxu0 0
        %464 = vmatprep.subr.bf16.mxu0 0
        %465 = vmatpush1.bf16.xpose.msra.mxu0 0
        %466 = vmatprep.subr.bf16.mxu0 0
        %467 = vmatpush1.bf16.xpose.msra.mxu0 0
        %468 = vmatprep.subr.bf16.mxu0 0
        %469 = vmatpush1.bf16.xpose.msra.mxu0 0
        %470 = vmatprep.subr.bf16.mxu0 0
        %471 = vmatpush1.bf16.xpose.msra.mxu0 0
        %472 = vmatprep.subr.bf16.mxu0 0
        %473 = vmatpush1.bf16.xpose.msra.mxu0 0
        %474 = vmatprep.subr.bf16.mxu0 0
        %475 = vmatpush1.bf16.xpose.msra.mxu0 0
        %476 = vmatprep.subr.bf16.mxu0 0
        %477 = vmatpush1.bf16.xpose.msra.mxu0 0
        %478 = vmatprep.subr.bf16.mxu0 0
        %479 = vmatpush1.bf16.xpose.msra.mxu0 0
        %480 = vmatprep.subr.bf16.mxu0 0
        %481 = vmatpush1.bf16.xpose.msra.mxu0 0
        %482 = vmatprep.subr.bf16.mxu0 0
        %483 = vmatpush1.bf16.xpose.msra.mxu0 0
        %484 = vmatprep.subr.bf16.mxu0 0
        %485 = vmatpush1.bf16.xpose.msra.mxu0 0
        %486 = vmatprep.subr.bf16.mxu0 0
        %487 = vmatpush1.bf16.xpose.msra.mxu0 0
        %488 = vmatprep.mubr.bf16.mxu0 0
        %489 = vmatmul.mubr.bf16.gmra.mrb[0].mxu0 %v451
        %v490 = vpop.f32.mrb[0].mxu0
        %v491 = vadd.f32 0.0, %v490
        %v492 = vpop.f32.mrb[0].mxu0
        %v493 = vpop.f32.mrb[0].mxu0
        %v494 = vpop.f32.mrb[0].mxu0
        %495 = vdwg.mxu0
        %v496 = vlaneseq
        %v497 = vshrl.u32 %v496, 7
        %s498 = smul.u32 %s20, 8
        %v499 = vstv %s498
        %v500 = vadd.s32 %v497, %v499
        %v501 = vlaneseq
        %v502 = vand.u32 %v501, 127
        %s503 = smul.u32 %s21, 8
        %v504 = vstv %s503
        %v505 = vadd.s32 %v502, %v504
        %vm506 = vcmp.ge.s32.totalorder %v500, %v505
        %v507 = vsel %vm506, 1, 0
        %vm508 = vcmp.eq.s32.totalorder %v507, 1
        %v509 = vsel %vm508, %v353, -1e+30
        %v510 = vsel %vm508, %v399, -1e+30
        %v511 = vsel %vm508, %v445, -1e+30
        %v512 = vsel %vm508, %v491, -1e+30
        %v513 = vld [vmem:[#allocation2] sm:$0xff]
        %v514 = vld [vmem:[#allocation2 + $0x8] sm:$0xff]
        %v515 = vld [vmem:[#allocation2 + $0x10] sm:$0xff]
        %v516 = vld [vmem:[#allocation2 + $0x18] sm:$0xff]
        %v517 = vsel %vm311, %v509, -inf
        %518 = vmax.xlane.f32.xlu0 %v517
        %v519 = vpop.xlane.xlu0 %518
        %v520 = vsel %vm311, %v510, -inf
        %521 = vmax.xlane.f32.xlu0 %v520
        %v522 = vpop.xlane.xlu0 %521
        %v523 = vsel %vm311, %v511, -inf
        %524 = vmax.xlane.f32.xlu0 %v523
        %v525 = vpop.xlane.xlu0 %524
        %v526 = vsel %vm311, %v512, -inf
        %527 = vmax.xlane.f32.xlu0 %v526
        %v528 = vpop.xlane.xlu0 %527
        %v529 = vmax.f32 %v513, %v519
        %v530 = vmax.f32 %v514, %v522
        %v531 = vmax.f32 %v515, %v525
        %v532 = vmax.f32 %v516, %v528
        %v533 = vsub.f32 %v513, %v529
        %v534 = vsub.f32 %v514, %v530
        %v535 = vsub.f32 %v515, %v531
        %v536 = vsub.f32 %v516, %v532
        %v537 = vmul.f32 %v533, 1.442695
        %v538 = vpow.pop %v537
        %v539 = vmul.f32 %v534, 1.442695
        %v540 = vpow.pop %v539
        %v541 = vmul.f32 %v535, 1.442695
        %v542 = vpow.pop %v541
        %v543 = vmul.f32 %v536, 1.442695
        %v544 = vpow.pop %v543
        %546 = vset.pattern.permute.xlu0 0
        %547 = vperm.xlu0 %546, %v529
        %v548 = vpop.permute.xlu0 %547
        %551 = vset.pattern.permute.xlu0 0
        %552 = vperm.xlu0 %551, %v530
        %v553 = vpop.permute.xlu0 %552
        %556 = vset.pattern.permute.xlu0 0
        %557 = vperm.xlu0 %556, %v531
        %v558 = vpop.permute.xlu0 %557
        %561 = vset.pattern.permute.xlu0 0
        %562 = vperm.xlu0 %561, %v532
        %v563 = vpop.permute.xlu0 %562
        %v565 = vsub.f32 %v509, %v548
        %v566 = vsub.f32 %v510, %v553
        %v567 = vsub.f32 %v511, %v558
        %v568 = vsub.f32 %v512, %v563
        %v569 = vmul.f32 %v565, 1.442695
        %v570 = vpow.pop %v569
        %v571 = vmul.f32 %v566, 1.442695
        %v572 = vpow.pop %v571
        %v573 = vmul.f32 %v567, 1.442695
        %v574 = vpow.pop %v573
        %v575 = vmul.f32 %v568, 1.442695
        %v576 = vpow.pop %v575
        %v577 = vld [vmem:[#allocation3] sm:$0xff]
        %v578 = vld [vmem:[#allocation3 + $0x8] sm:$0xff]
        %v579 = vld [vmem:[#allocation3 + $0x10] sm:$0xff]
        %v580 = vld [vmem:[#allocation3 + $0x18] sm:$0xff]
        %v581 = vmul.f32 %v538, %v577
        %v582 = vmul.f32 %v540, %v578
        %v583 = vmul.f32 %v542, %v579
        %v584 = vmul.f32 %v544, %v580
        %v585 = vsel %vm311, %v570, 0.0
        %586 = vadd.xlane.f32.xlu0 %v585
        %v587 = vpop.xlane.xlu0 %586
        %v588 = vsel %vm311, %v572, 0.0
        %589 = vadd.xlane.f32.xlu0 %v588
        %v590 = vpop.xlane.xlu0 %589
        %v591 = vsel %vm311, %v574, 0.0
        %592 = vadd.xlane.f32.xlu0 %v591
        %v593 = vpop.xlane.xlu0 %592
        %v594 = vsel %vm311, %v576, 0.0
        %595 = vadd.xlane.f32.xlu0 %v594
        %v596 = vpop.xlane.xlu0 %595
        %v597 = vadd.f32 %v581, %v587
        %v598 = vadd.f32 %v582, %v590
        %v599 = vadd.f32 %v583, %v593
        %v600 = vadd.f32 %v584, %v596
        %vm601 = vcmask 7168
        %602 = vst.msk [vmem:[#allocation3] sm:$0xff] %vm601, %v597
        %603 = vst.msk [vmem:[#allocation3 + $0x8] sm:$0xff] %vm601, %v598
        %604 = vst.msk [vmem:[#allocation3 + $0x10] sm:$0xff] %vm601, %v599
        %605 = vst.msk [vmem:[#allocation3 + $0x18] sm:$0xff] %vm601, %v600
        %v606 = vld [vmem:[#allocation4] sm:$0xff]
        %v607 = vld [vmem:[#allocation4 + $0x8] sm:$0xff]
        %v608 = vld [vmem:[#allocation4 + $0x10] sm:$0xff]
        %v609 = vld [vmem:[#allocation4 + $0x18] sm:$0xff]
        %611 = vset.pattern.permute.xlu0 0
        %612 = vperm.xlu0 %611, %v538
        %v613 = vpop.permute.xlu0 %612
        %616 = vset.pattern.permute.xlu0 0
        %617 = vperm.xlu0 %616, %v540
        %v618 = vpop.permute.xlu0 %617
        %621 = vset.pattern.permute.xlu0 0
        %622 = vperm.xlu0 %621, %v542
        %v623 = vpop.permute.xlu0 %622
        %626 = vset.pattern.permute.xlu0 0
        %627 = vperm.xlu0 %626, %v544
        %v628 = vpop.permute.xlu0 %627
        %v630 = vmul.f32 %v613, %v606
        %v631 = vmul.f32 %v618, %v607
        %v632 = vmul.f32 %v623, %v608
        %v633 = vmul.f32 %v628, %v609
        %v634 = vpack.c.bf16 %v570, %v570
        %v635 = vpack.c.bf16 %v572, %v572
        %v636 = vpack.c.bf16 %v574, %v574
        %v637 = vpack.c.bf16 %v576, %v576
        %v639 = vsel %vm311, %v634, 0
        %vm641 = vcmask 1043456
        %v643 = vsel %vm641, %v307, 0
        %645 = vmatprep.subr.bf16.mxu0 0
        %646 = vmatpush1.bf16.msra.mxu0 %v643
        %647 = vmatprep.subr.bf16.mxu0 0
        %648 = vmatpush1.bf16.msra.mxu0 0
        %649 = vmatprep.subr.bf16.mxu0 0
        %650 = vmatpush1.bf16.msra.mxu0 0
        %651 = vmatprep.subr.bf16.mxu0 0
        %652 = vmatpush1.bf16.msra.mxu0 0
        %653 = vmatprep.subr.bf16.mxu0 0
        %654 = vmatpush1.bf16.msra.mxu0 0
        %655 = vmatprep.subr.bf16.mxu0 0
        %656 = vmatpush1.bf16.msra.mxu0 0
        %657 = vmatprep.subr.bf16.mxu0 0
        %658 = vmatpush1.bf16.msra.mxu0 0
        %659 = vmatprep.subr.bf16.mxu0 0
        %660 = vmatpush1.bf16.msra.mxu0 0
        %661 = vmatprep.subr.bf16.mxu0 0
        %662 = vmatpush1.bf16.msra.mxu0 0
        %663 = vmatprep.subr.bf16.mxu0 0
        %664 = vmatpush1.bf16.msra.mxu0 0
        %665 = vmatprep.subr.bf16.mxu0 0
        %666 = vmatpush1.bf16.msra.mxu0 0
        %667 = vmatprep.subr.bf16.mxu0 0
        %668 = vmatpush1.bf16.msra.mxu0 0
        %669 = vmatprep.subr.bf16.mxu0 0
        %670 = vmatpush1.bf16.msra.mxu0 0
        %671 = vmatprep.subr.bf16.mxu0 0
        %672 = vmatpush1.bf16.msra.mxu0 0
        %673 = vmatprep.subr.bf16.mxu0 0
        %674 = vmatpush1.bf16.msra.mxu0 0
        %675 = vmatprep.subr.bf16.mxu0 0
        %676 = vmatpush1.bf16.msra.mxu0 0
        %677 = vmatprep.mubr.bf16.mxu0 0
        %678 = vmatmul.mubr.bf16.gmra.mrb[0].mxu0 %v639
        %v679 = vpop.f32.mrb[0].mxu0
        %v680 = vadd.f32 0.0, %v679
        %v681 = vpop.f32.mrb[0].mxu0
        %v682 = vpop.f32.mrb[0].mxu0
        %v683 = vpop.f32.mrb[0].mxu0
        %684 = vdwg.mxu0
        %v686 = vsel %vm311, %v635, 0
        %v689 = vsel %vm641, %v308, 0
        %691 = vmatprep.subr.bf16.mxu0 0
        %692 = vmatpush1.bf16.msra.mxu0 %v689
        %693 = vmatprep.subr.bf16.mxu0 0
        %694 = vmatpush1.bf16.msra.mxu0 0
        %695 = vmatprep.subr.bf16.mxu0 0
        %696 = vmatpush1.bf16.msra.mxu0 0
        %697 = vmatprep.subr.bf16.mxu0 0
        %698 = vmatpush1.bf16.msra.mxu0 0
        %699 = vmatprep.subr.bf16.mxu0 0
        %700 = vmatpush1.bf16.msra.mxu0 0
        %701 = vmatprep.subr.bf16.mxu0 0
        %702 = vmatpush1.bf16.msra.mxu0 0
        %703 = vmatprep.subr.bf16.mxu0 0
        %704 = vmatpush1.bf16.msra.mxu0 0
        %705 = vmatprep.subr.bf16.mxu0 0
        %706 = vmatpush1.bf16.msra.mxu0 0
        %707 = vmatprep.subr.bf16.mxu0 0
        %708 = vmatpush1.bf16.msra.mxu0 0
        %709 = vmatprep.subr.bf16.mxu0 0
        %710 = vmatpush1.bf16.msra.mxu0 0
        %711 = vmatprep.subr.bf16.mxu0 0
        %712 = vmatpush1.bf16.msra.mxu0 0
        %713 = vmatprep.subr.bf16.mxu0 0
        %714 = vmatpush1.bf16.msra.mxu0 0
        %715 = vmatprep.subr.bf16.mxu0 0
        %716 = vmatpush1.bf16.msra.mxu0 0
        %717 = vmatprep.subr.bf16.mxu0 0
        %718 = vmatpush1.bf16.msra.mxu0 0
        %719 = vmatprep.subr.bf16.mxu0 0
        %720 = vmatpush1.bf16.msra.mxu0 0
        %721 = vmatprep.subr.bf16.mxu0 0
        %722 = vmatpush1.bf16.msra.mxu0 0
        %723 = vmatprep.mubr.bf16.mxu0 0
        %724 = vmatmul.mubr.bf16.gmra.mrb[0].mxu0 %v686
        %v725 = vpop.f32.mrb[0].mxu0
        %v726 = vadd.f32 0.0, %v725
        %v727 = vpop.f32.mrb[0].mxu0
        %v728 = vpop.f32.mrb[0].mxu0
        %v729 = vpop.f32.mrb[0].mxu0
        %730 = vdwg.mxu0
        %v732 = vsel %vm311, %v636, 0
        %v735 = vsel %vm641, %v309, 0
        %737 = vmatprep.subr.bf16.mxu0 0
        %738 = vmatpush1.bf16.msra.mxu0 %v735
        %739 = vmatprep.subr.bf16.mxu0 0
        %740 = vmatpush1.bf16.msra.mxu0 0
        %741 = vmatprep.subr.bf16.mxu0 0
        %742 = vmatpush1.bf16.msra.mxu0 0
        %743 = vmatprep.subr.bf16.mxu0 0
        %744 = vmatpush1.bf16.msra.mxu0 0
        %745 = vmatprep.subr.bf16.mxu0 0
        %746 = vmatpush1.bf16.msra.mxu0 0
        %747 = vmatprep.subr.bf16.mxu0 0
        %748 = vmatpush1.bf16.msra.mxu0 0
        %749 = vmatprep.subr.bf16.mxu0 0
        %750 = vmatpush1.bf16.msra.mxu0 0
        %751 = vmatprep.subr.bf16.mxu0 0
        %752 = vmatpush1.bf16.msra.mxu0 0
        %753 = vmatprep.subr.bf16.mxu0 0
        %754 = vmatpush1.bf16.msra.mxu0 0
        %755 = vmatprep.subr.bf16.mxu0 0
        %756 = vmatpush1.bf16.msra.mxu0 0
        %757 = vmatprep.subr.bf16.mxu0 0
        %758 = vmatpush1.bf16.msra.mxu0 0
        %759 = vmatprep.subr.bf16.mxu0 0
        %760 = vmatpush1.bf16.msra.mxu0 0
        %761 = vmatprep.subr.bf16.mxu0 0
        %762 = vmatpush1.bf16.msra.mxu0 0
        %763 = vmatprep.subr.bf16.mxu0 0
        %764 = vmatpush1.bf16.msra.mxu0 0
        %765 = vmatprep.subr.bf16.mxu0 0
        %766 = vmatpush1.bf16.msra.mxu0 0
        %767 = vmatprep.subr.bf16.mxu0 0
        %768 = vmatpush1.bf16.msra.mxu0 0
        %769 = vmatprep.mubr.bf16.mxu0 0
        %770 = vmatmul.mubr.bf16.gmra.mrb[0].mxu0 %v732
        %v771 = vpop.f32.mrb[0].mxu0
        %v772 = vadd.f32 0.0, %v771
        %v773 = vpop.f32.mrb[0].mxu0
        %v774 = vpop.f32.mrb[0].mxu0
        %v775 = vpop.f32.mrb[0].mxu0
        %776 = vdwg.mxu0
        %v778 = vsel %vm311, %v637, 0
        %v781 = vsel %vm641, %v310, 0
        %783 = vmatprep.subr.bf16.mxu0 0
        %784 = vmatpush1.bf16.msra.mxu0 %v781
        %785 = vmatprep.subr.bf16.mxu0 0
        %786 = vmatpush1.bf16.msra.mxu0 0
        %787 = vmatprep.subr.bf16.mxu0 0
        %788 = vmatpush1.bf16.msra.mxu0 0
        %789 = vmatprep.subr.bf16.mxu0 0
        %790 = vmatpush1.bf16.msra.mxu0 0
        %791 = vmatprep.subr.bf16.mxu0 0
        %792 = vmatpush1.bf16.msra.mxu0 0
        %793 = vmatprep.subr.bf16.mxu0 0
        %794 = vmatpush1.bf16.msra.mxu0 0
        %795 = vmatprep.subr.bf16.mxu0 0
        %796 = vmatpush1.bf16.msra.mxu0 0
        %797 = vmatprep.subr.bf16.mxu0 0
        %798 = vmatpush1.bf16.msra.mxu0 0
        %799 = vmatprep.subr.bf16.mxu0 0
        %800 = vmatpush1.bf16.msra.mxu0 0
        %801 = vmatprep.subr.bf16.mxu0 0
        %802 = vmatpush1.bf16.msra.mxu0 0
        %803 = vmatprep.subr.bf16.mxu0 0
        %804 = vmatpush1.bf16.msra.mxu0 0
        %805 = vmatprep.subr.bf16.mxu0 0
        %806 = vmatpush1.bf16.msra.mxu0 0
        %807 = vmatprep.subr.bf16.mxu0 0
        %808 = vmatpush1.bf16.msra.mxu0 0
        %809 = vmatprep.subr.bf16.mxu0 0
        %810 = vmatpush1.bf16.msra.mxu0 0
        %811 = vmatprep.subr.bf16.mxu0 0
        %812 = vmatpush1.bf16.msra.mxu0 0
        %813 = vmatprep.subr.bf16.mxu0 0
        %814 = vmatpush1.bf16.msra.mxu0 0
        %815 = vmatprep.mubr.bf16.mxu0 0
        %816 = vmatmul.mubr.bf16.gmra.mrb[0].mxu0 %v778
        %v817 = vpop.f32.mrb[0].mxu0
        %v818 = vadd.f32 0.0, %v817
        %v819 = vpop.f32.mrb[0].mxu0
        %v820 = vpop.f32.mrb[0].mxu0
        %v821 = vpop.f32.mrb[0].mxu0
        %822 = vdwg.mxu0
        %v823 = vadd.f32 %v630, %v680
        %v824 = vadd.f32 %v631, %v726
        %v825 = vadd.f32 %v632, %v772
        %v826 = vadd.f32 %v633, %v818
        %827 = vst.msk [vmem:[#allocation4] sm:$0xff] %vm311, %v823
        %828 = vst.msk [vmem:[#allocation4 + $0x8] sm:$0xff] %vm311, %v824
        %829 = vst.msk [vmem:[#allocation4 + $0x10] sm:$0xff] %vm311, %v825
        %830 = vst.msk [vmem:[#allocation4 + $0x18] sm:$0xff] %vm311, %v826
        %831 = vst.msk [vmem:[#allocation2] sm:$0xff] %vm601, %v529
        %832 = vst.msk [vmem:[#allocation2 + $0x8] sm:$0xff] %vm601, %v530
        %833 = vst.msk [vmem:[#allocation2 + $0x10] sm:$0xff] %vm601, %v531
        %834 = vst.msk [vmem:[#allocation2 + $0x18] sm:$0xff] %vm601, %v532
      $region40: #{causal_self_attention.4} parent=31 // pred_fallthru
        _
      %p835 = scmp.eq.s32.totalorder %s21, %s20
      // Predicated region
      $region41: #{causal_self_attention.4} parent=31 // pred_check
        %p836 = pneg %p835
      $region42: #{causal_self_attention.4} parent=31 // pred_check_branch
        %838 = sbr.rel (%p836) target = $region44
      $region43: #{causal_self_attention.4} parent=31 // pred_region
        %v839 = vld [vmem:[#allocation3] sm:$0xff]
        %v840 = vld [vmem:[#allocation3 + $0x8] sm:$0xff]
        %v841 = vld [vmem:[#allocation3 + $0x10] sm:$0xff]
        %v842 = vld [vmem:[#allocation3 + $0x18] sm:$0xff]
        %v843 = vrcp.pop %v839
        %v844 = vrcp.pop %v840
        %v845 = vrcp.pop %v841
        %v846 = vrcp.pop %v842
        %v847 = vld [vmem:[#allocation4] sm:$0xff]
        %v848 = vld [vmem:[#allocation4 + $0x8] sm:$0xff]
        %v849 = vld [vmem:[#allocation4 + $0x10] sm:$0xff]
        %v850 = vld [vmem:[#allocation4 + $0x18] sm:$0xff]
        %852 = vset.pattern.permute.xlu0 0
        %853 = vperm.xlu0 %852, %v843
        %v854 = vpop.permute.xlu0 %853
        %857 = vset.pattern.permute.xlu0 0
        %858 = vperm.xlu0 %857, %v844
        %v859 = vpop.permute.xlu0 %858
        %862 = vset.pattern.permute.xlu0 0
        %863 = vperm.xlu0 %862, %v845
        %v864 = vpop.permute.xlu0 %863
        %867 = vset.pattern.permute.xlu0 0
        %868 = vperm.xlu0 %867, %v846
        %v869 = vpop.permute.xlu0 %868
        %v871 = vmul.f32 %v847, %v854
        %v872 = vmul.f32 %v848, %v859
        %v873 = vmul.f32 %v849, %v864
        %v874 = vmul.f32 %v850, %v869
        %v875 = vpack.c.bf16 %v871, %v871
        %v876 = vpack.c.bf16 %v872, %v872
        %v877 = vpack.c.bf16 %v873, %v873
        %v878 = vpack.c.bf16 %v874, %v874
        %vm879 = vcmask 60416
        %880 = vst.msk [vmem:[%s270] sm:$0xf] %vm879, %v875
        %881 = vst.msk [vmem:[%s270 + $0x4] sm:$0xf] %vm879, %v876
        %882 = vst.msk [vmem:[%s270 + $0x8] sm:$0xf] %vm879, %v877
        %883 = vst.msk [vmem:[%s270 + $0xc] sm:$0xf] %vm879, %v878
      $region44: #{causal_self_attention.4} parent=31 // pred_fallthru
        _
      %p884 = scmp.lt.s32.totalorder %s19, 1
      %s885 = scalar_select %p884, %s19, 1
      %p886 = scmp.lt.s32.totalorder %s20, 0
      %s887 = scalar_select %p886, %s20, 0
      %s888 = smul.addr %s885, 4
      %s889 = sadd.s32 %s887, %s888
      %s890 = smul.addr %s889, 4
      %s891 = scalar_lea.vmem %s3, %s890
      // Predicated region
      $region45: #{causal_self_attention.4} parent=31 // pred_check
        %p892 = pneg %p137
      $region46: #{causal_self_attention.4} parent=31 // pred_check_branch
        %894 = sbr.rel (%p892) target = $region48
      $region47: #{causal_self_attention.4} parent=31 // pred_region
        _
      $region48: #{causal_self_attention.4} parent=31 // pred_fallthru
        _
    $region32: #{causal_self_attention.4} parent=5 // pred_fallthru
      _
    %p895 = scmp.le.s32.totalorder 2, %s9
    // Predicated region
    $region49: #{causal_self_attention.4} parent=5 // pred_check
      %p896 = pneg %p895
    $region50: #{causal_self_attention.4} parent=5 // pred_check_branch
      %898 = sbr.rel (%p896) target = $region52
    $region51: #{causal_self_attention.4} parent=5 // pred_region
      %s899 = ssub.s32 %s9, 2
      // Predicated region
      $region53: #{causal_self_attention.4} parent=51 // pred_check
        %p900 = pneg %p143
      $region54: #{causal_self_attention.4} parent=51 // pred_check_branch
        %902 = sbr.rel (%p900) target = $region56
      $region55: #{causal_self_attention.4} parent=51 // pred_region
        %p903 = scmp.lt.s32.totalorder %s22, 1
        %s904 = scalar_select %p903, %s22, 1
        %p905 = scmp.lt.s32.totalorder %s23, 0
        %s906 = scalar_select %p905, %s23, 0
        %s907 = smul.addr %s904, 4
        %s908 = sadd.s32 %s906, %s907
        %s909 = smul.addr %s908, 4
        %s910 = scalar_lea.vmem %s3, %s909
      $region56: #{causal_self_attention.4} parent=51 // pred_fallthru
        _
    $region52: #{causal_self_attention.4} parent=5 // pred_fallthru
      _
  $region6: #{causal_self_attention.4} parent=0 // loop_footer
    %s13 = sadd.s32 1, %s9
  $region7: #{causal_self_attention.4} parent=0 // loop_footer_branch
    %8 = sbr.rel target = $region3
  $region8: #{causal_self_attention.4} parent=0 // loop_exit
    _

</llo_original>
